<compile_context>
chip_gen: v5e
topology: v5e:2x2
jax: 0.10.0
libtpu: 0.0.40
codegen_flags: <defaults>
</compile_context>

<pallas_src>
import functools

import jax
import jax.numpy as jnp
from jax.experimental import pallas as pl
from jax.experimental.pallas import tpu as pltpu

D_IN, H1, H2, D_OUT = 4, 128, 64, 1
K_PAD = 8  # layer-1 contraction dim zero-padded to a full f32 sublane tile


def _chip_kind() -> str:
    try:
        return jax.devices()[0].device_kind.lower()
    except Exception:  # no devices / interpret-only environments
        return ""


def _compute_dtype():
    """bf16 VPU/EUP math only where it is native (v6e / v7x); f32 elsewhere."""
    kind = _chip_kind()
    if ("v6" in kind) or ("v7" in kind) or ("7x" in kind):
        return jnp.bfloat16
    return jnp.float32


def _has_two_tensorcores() -> bool:
    kind = _chip_kind()
    return ("v7" in kind) or ("7x" in kind)


def _round_up(a, b):
    return pl.cdiv(a, b) * b


def _pinn_kernel(x_ref, w1_ref, b1_ref, w2_ref, b2_ref, w3_ref, b3_ref, o_ref,
                 *, compute_dtype):
    # Lane-dense transposed layout: batch on the lane (last) axis.
    #   x_ref : (K_PAD, TB) compute_dtype   (rows 4..7 are zero padding)
    #   w*_ref: PyTorch-native (out_features, in_features), compute_dtype
    #   b*_ref: (out_features, 1) f32 -> broadcasts over the lane (batch) axis
    #   o_ref : (1, TB) f32
    xin = x_ref[...]                                           # (K_PAD, TB)

    # Layer 1 (Linear 4->128) on the otherwise-idle MXU, f32 accumulation.
    h = jnp.dot(w1_ref[...], xin, preferred_element_type=jnp.float32)
    h = (h + b1_ref[...]).astype(compute_dtype)                # (128, TB)
    h = h * jax.nn.sigmoid(h)                                  # SiLU (VPU/EUP)

    # Layer 2 (Linear 128->64) on the MXU.
    h = jnp.dot(w2_ref[...], h, preferred_element_type=jnp.float32)
    h = (h + b2_ref[...]).astype(compute_dtype)                # (64, TB)
    h = h * jax.nn.sigmoid(h)                                  # SiLU

    # Layer 3 (Linear 64->1) -> lane-dense (1, TB) output.
    o = jnp.dot(w3_ref[...], h, preferred_element_type=jnp.float32) + b3_ref[...]
    o_ref[...] = o.astype(o_ref.dtype)


@functools.partial(jax.jit, static_argnames=("tb",))
def pinn_forward(x, y, m, n, params, *, tb=8192):
    """x, y, m, n: (B, 1) float32 arrays.  Returns (B, 1) float32."""
    w1, b1, w2, b2, w3, b3 = params
    B = x.shape[0]

    compute_dtype = _compute_dtype()

    # Build the (K_PAD, B) input slab without any transpose: (B,1) -> (1,B) is
    # a free reshape; concat along the sublane axis; zero rows pad K to 8.
    rows = [a.reshape(1, B).astype(compute_dtype) for a in (x, y, m, n)]
    rows.append(jnp.zeros((K_PAD - D_IN, B), compute_dtype))
    inputs_t = jnp.concatenate(rows, axis=0)                   # (K_PAD, B)

    # Weights in compute dtype; w1 zero-padded on the contraction dim.
    w1p = jnp.pad(w1.astype(compute_dtype), ((0, 0), (0, K_PAD - D_IN)))
    w2c = w2.astype(compute_dtype)
    w3c = w3.astype(compute_dtype)

    # Batch tile: lane-dense multiple of 128, at most `tb`.  Only v7x (2
    # TensorCores) forces >= 2 grid steps so both cores get work; on
    # single-TC v5e/v6e a small batch stays in a single step.
    min_steps = 2 if (_has_two_tensorcores() and B >= 256) else 1
    tb_eff = min(tb, max(128, _round_up(pl.cdiv(B, min_steps), 128)))
    bp = _round_up(B, tb_eff)
    if bp != B:
        inputs_t = jnp.pad(inputs_t, ((0, 0), (0, bp - B)))
    grid = (bp // tb_eff,)

    weight_bytes = 4 * (D_IN * H1 + H1 + H1 * H2 + H2 + H2 * D_OUT + D_OUT)
    cost = pl.CostEstimate(
        flops=2 * bp * (D_IN * H1 + H1 * H2 + H2 * D_OUT),
        transcendentals=2 * bp * (H1 + H2),        # exp + reciprocal per sigmoid
        bytes_accessed=4 * bp * (D_IN + D_OUT) + weight_bytes,
    )

    out_t = pl.pallas_call(
        functools.partial(_pinn_kernel, compute_dtype=compute_dtype),
        out_shape=jax.ShapeDtypeStruct((D_OUT, bp), jnp.float32),
        grid_spec=pltpu.PrefetchScalarGridSpec(
            num_scalar_prefetch=0,
            grid=grid,
            in_specs=[
                pl.BlockSpec((K_PAD, tb_eff), lambda i: (0, i)),  # input tile
                pl.BlockSpec((H1, K_PAD), lambda i: (0, 0)),      # W1 (resident)
                pl.BlockSpec((H1, 1), lambda i: (0, 0)),          # b1
                pl.BlockSpec((H2, H1), lambda i: (0, 0)),         # W2
                pl.BlockSpec((H2, 1), lambda i: (0, 0)),          # b2
                pl.BlockSpec((D_OUT, H2), lambda i: (0, 0)),      # W3
                pl.BlockSpec((D_OUT, 1), lambda i: (0, 0)),       # b3
            ],
            out_specs=pl.BlockSpec((D_OUT, tb_eff), lambda i: (0, i)),
        ),
        compiler_params=pltpu.CompilerParams(
            dimension_semantics=("parallel",),
            # Large f32 tiles need more than v5e's ~16 MiB scoped default;
            # 48 MiB is safely below every chip's physical VMEM.
            vmem_limit_bytes=48 * 1024 * 1024,
        ),
        cost_estimate=cost,
    )(inputs_t, w1p, b1, w2c, b2, w3c, b3)

    return out_t[0, :B].reshape(B, 1)                          # (B, 1) f32


def init_params(key):
    """PyTorch nn.Linear-style init: U(-1/sqrt(fan_in), +1/sqrt(fan_in)).

    Weights stored PyTorch-native (out_features, in_features); biases as
    (out_features, 1) so they broadcast over the lane (batch) axis in-kernel.
    """
    def linear(key, fan_in, fan_out):
        kw, kb = jax.random.split(key)
        bound = 1.0 / jnp.sqrt(fan_in)
        w = jax.random.uniform(kw, (fan_out, fan_in), jnp.float32, -bound, bound)
        b = jax.random.uniform(kb, (fan_out, 1), jnp.float32, -bound, bound)
        return w, b

    k1, k2, k3 = jax.random.split(key, 3)
    w1, b1 = linear(k1, D_IN, H1)
    w2, b2 = linear(k2, H1, H2)
    w3, b3 = linear(k3, H2, D_OUT)
    return (w1, b1, w2, b2, w3, b3)


if __name__ == "__main__":
    key = jax.random.PRNGKey(0)
    kp, kx, ky, km, kn = jax.random.split(key, 5)

    params = init_params(kp)

    # Non-multiple-of-128 batch: exercises the padding path (and the 2-step
    # split on v7x).
    B = 300
    x = jax.random.normal(kx, (B, 1), jnp.float32)
    y = jax.random.normal(ky, (B, 1), jnp.float32)
    m = jax.random.normal(km, (B, 1), jnp.float32)
    n = jax.random.normal(kn, (B, 1), jnp.float32)

    out = pinn_forward(x, y, m, n, params)
    jax.block_until_ready(out)

    # Pure-JAX reference (PyTorch layout: y = inp @ W.T + b), f32 HIGHEST.
    w1, b1, w2, b2, w3, b3 = params
    inp = jnp.concatenate([x, y, m, n], axis=1)
    hp = jax.lax.Precision.HIGHEST
    h = jnp.dot(inp, w1.T, precision=hp) + b1.T
    h = h * jax.nn.sigmoid(h)
    h = jnp.dot(h, w2.T, precision=hp) + b2.T
    h = h * jax.nn.sigmoid(h)
    ref = jnp.dot(h, w3.T, precision=hp) + b3.T

    # Tolerance depends on the chip-selected compute dtype (bf16 on v6e/v7x).
    tol = 5e-2 if _compute_dtype() == jnp.bfloat16 else 1e-4

    assert out.shape == (B, 1)
    assert jnp.allclose(out, ref, atol=tol, rtol=tol), float(
        jnp.max(jnp.abs(out - ref)))

    print("KERNEL_OK")
</pallas_src>

<mosaic_0001>
module attributes {stable_mosaic.version = 11 : i64} {
  func.func @_pinn_kernel(%arg0: i32, %arg1: memref<8x384xf32, #tpu.memory_space<vmem>>, %arg2: memref<128x8xf32, #tpu.memory_space<vmem>>, %arg3: memref<128x1xf32, #tpu.memory_space<vmem>>, %arg4: memref<64x128xf32, #tpu.memory_space<vmem>>, %arg5: memref<64x1xf32, #tpu.memory_space<vmem>>, %arg6: memref<1x64xf32, #tpu.memory_space<vmem>>, %arg7: memref<1x1xf32, #tpu.memory_space<vmem>>, %arg8: memref<1x384xf32, #tpu.memory_space<vmem>>) attributes {dimension_semantics = [#tpu.dimension_semantics<parallel>], iteration_bounds = array<i64: 1>, scalar_prefetch = 0 : i64, scratch_operands = 0 : i64, tpu.core_type = #tpu.core_type<tc>, window_params = [{transform_indices = @transform_0, window_bounds = array<i64: 8, 384>}, {pipeline_mode = #tpu.pipeline_mode<synchronous>, transform_indices = @transform_1, window_bounds = array<i64: 128, 8>}, {pipeline_mode = #tpu.pipeline_mode<synchronous>, transform_indices = @transform_2, window_bounds = array<i64: 128, 1>}, {pipeline_mode = #tpu.pipeline_mode<synchronous>, transform_indices = @transform_3, window_bounds = array<i64: 64, 128>}, {pipeline_mode = #tpu.pipeline_mode<synchronous>, transform_indices = @transform_4, window_bounds = array<i64: 64, 1>}, {pipeline_mode = #tpu.pipeline_mode<synchronous>, transform_indices = @transform_5, window_bounds = array<i64: 1, 64>}, {pipeline_mode = #tpu.pipeline_mode<synchronous>, transform_indices = @transform_6, window_bounds = array<i64: 1, 1>}, {transform_indices = @transform_7, window_bounds = array<i64: 1, 384>}]} {
    %c0 = arith.constant 0 : index
    %c0_0 = arith.constant 0 : index
    %0 = vector.load %arg1[%c0, %c0_0] : memref<8x384xf32, #tpu.memory_space<vmem>>, vector<8x384xf32>
    %c0_1 = arith.constant 0 : index
    %c0_2 = arith.constant 0 : index
    %1 = vector.load %arg2[%c0_1, %c0_2] : memref<128x8xf32, #tpu.memory_space<vmem>>, vector<128x8xf32>
    %cst = arith.constant dense<0.000000e+00> : vector<128x384xf32>
    %2 = tpu.matmul %1, %0, %cst {dimension_numbers = #tpu.dot_dimension_numbers<[1], [0], [0], [1], [0, 0, 1, 1], [], []>} : vector<128x8xf32>, vector<8x384xf32>, vector<128x384xf32> -> vector<128x384xf32>
    %c0_3 = arith.constant 0 : index
    %c0_4 = arith.constant 0 : index
    %3 = vector.load %arg3[%c0_3, %c0_4] : memref<128x1xf32, #tpu.memory_space<vmem>>, vector<128x1xf32>
    %4 = vector.broadcast %3 : vector<128x1xf32> to vector<128x384xf32>
    %5 = arith.addf %2, %4 : vector<128x384xf32>
    %6 = arith.negf %5 : vector<128x384xf32>
    %7 = math.exp %6 : vector<128x384xf32>
    %cst_5 = arith.constant 1.000000e+00 : f32
    %8 = vector.broadcast %cst_5 : f32 to vector<128x384xf32>
    %9 = arith.addf %8, %7 : vector<128x384xf32>
    %10 = arith.divf %8, %9 : vector<128x384xf32>
    %11 = arith.mulf %5, %10 : vector<128x384xf32>
    %c0_6 = arith.constant 0 : index
    %c0_7 = arith.constant 0 : index
    %12 = vector.load %arg4[%c0_6, %c0_7] : memref<64x128xf32, #tpu.memory_space<vmem>>, vector<64x128xf32>
    %cst_8 = arith.constant dense<0.000000e+00> : vector<64x384xf32>
    %13 = tpu.matmul %12, %11, %cst_8 {dimension_numbers = #tpu.dot_dimension_numbers<[1], [0], [0], [1], [0, 0, 1, 1], [], []>} : vector<64x128xf32>, vector<128x384xf32>, vector<64x384xf32> -> vector<64x384xf32>
    %c0_9 = arith.constant 0 : index
    %c0_10 = arith.constant 0 : index
    %14 = vector.load %arg5[%c0_9, %c0_10] : memref<64x1xf32, #tpu.memory_space<vmem>>, vector<64x1xf32>
    %15 = vector.broadcast %14 : vector<64x1xf32> to vector<64x384xf32>
    %16 = arith.addf %13, %15 : vector<64x384xf32>
    %17 = arith.negf %16 : vector<64x384xf32>
    %18 = math.exp %17 : vector<64x384xf32>
    %cst_11 = arith.constant 1.000000e+00 : f32
    %19 = vector.broadcast %cst_11 : f32 to vector<64x384xf32>
    %20 = arith.addf %19, %18 : vector<64x384xf32>
    %21 = arith.divf %19, %20 : vector<64x384xf32>
    %22 = arith.mulf %16, %21 : vector<64x384xf32>
    %c0_12 = arith.constant 0 : index
    %c0_13 = arith.constant 0 : index
    %23 = vector.load %arg6[%c0_12, %c0_13] : memref<1x64xf32, #tpu.memory_space<vmem>>, vector<1x64xf32>
    %cst_14 = arith.constant dense<0.000000e+00> : vector<1x384xf32>
    %24 = tpu.matmul %23, %22, %cst_14 {dimension_numbers = #tpu.dot_dimension_numbers<[1], [0], [0], [1], [0, 0, 1, 1], [], []>} : vector<1x64xf32>, vector<64x384xf32>, vector<1x384xf32> -> vector<1x384xf32>
    %c0_15 = arith.constant 0 : index
    %c0_16 = arith.constant 0 : index
    %25 = vector.load %arg7[%c0_15, %c0_16] : memref<1x1xf32, #tpu.memory_space<vmem>>, vector<1x1xf32>
    %26 = vector.broadcast %25 : vector<1x1xf32> to vector<1x384xf32>
    %27 = arith.addf %24, %26 : vector<1x384xf32>
    %c0_17 = arith.constant 0 : index
    %c0_18 = arith.constant 0 : index
    %28 = vector.load %arg8[%c0_17, %c0_18] : memref<1x384xf32, #tpu.memory_space<vmem>>, vector<1x384xf32>
    tpu.vector_store %arg8[%c0_17, %c0_18], %27 {strides = array<i32>} : memref<1x384xf32, #tpu.memory_space<vmem>>, vector<1x384xf32>,
    return
  }
  func.func @transform_0(%arg0: i32) -> (i32, i32) {
    %c0_i32 = arith.constant 0 : i32
    %c0_i32_0 = arith.constant 0 : i32
    return %c0_i32, %arg0 : i32, i32
  }
  func.func @transform_1(%arg0: i32) -> (i32, i32) {
    %c0_i32 = arith.constant 0 : i32
    %c0_i32_0 = arith.constant 0 : i32
    %c0_i32_1 = arith.constant 0 : i32
    return %c0_i32, %c0_i32_0 : i32, i32
  }
  func.func @transform_2(%arg0: i32) -> (i32, i32) {
    %c0_i32 = arith.constant 0 : i32
    %c0_i32_0 = arith.constant 0 : i32
    %c0_i32_1 = arith.constant 0 : i32
    return %c0_i32, %c0_i32_0 : i32, i32
  }
  func.func @transform_3(%arg0: i32) -> (i32, i32) {
    %c0_i32 = arith.constant 0 : i32
    %c0_i32_0 = arith.constant 0 : i32
    %c0_i32_1 = arith.constant 0 : i32
    return %c0_i32, %c0_i32_0 : i32, i32
  }
  func.func @transform_4(%arg0: i32) -> (i32, i32) {
    %c0_i32 = arith.constant 0 : i32
    %c0_i32_0 = arith.constant 0 : i32
    %c0_i32_1 = arith.constant 0 : i32
    return %c0_i32, %c0_i32_0 : i32, i32
  }
  func.func @transform_5(%arg0: i32) -> (i32, i32) {
    %c0_i32 = arith.constant 0 : i32
    %c0_i32_0 = arith.constant 0 : i32
    %c0_i32_1 = arith.constant 0 : i32
    return %c0_i32, %c0_i32_0 : i32, i32
  }
  func.func @transform_6(%arg0: i32) -> (i32, i32) {
    %c0_i32 = arith.constant 0 : i32
    %c0_i32_0 = arith.constant 0 : i32
    %c0_i32_1 = arith.constant 0 : i32
    return %c0_i32, %c0_i32_0 : i32, i32
  }
  func.func @transform_7(%arg0: i32) -> (i32, i32) {
    %c0_i32 = arith.constant 0 : i32
    %c0_i32_0 = arith.constant 0 : i32
    return %c0_i32, %arg0 : i32, i32
  }
}

</mosaic_0001>

<llo_original>
// kernel: pinn_forward.1
$region0: #{pinn_forward.1}
  #allocation0 [shape = 'u32[]', space=smem, size = 0x4, offset = 0x4, fixed_abs, tag = 'smem constant byte address 0x4 - core index']
  #allocation1 [shape = 'u32[72,128]{1,0:T(1,128)}', space=vmem, size = 0x9000, scoped, tag = 'internal scratch']
  #allocation2 [shape = 'f32[1,1]{1,0:T(1,128)S(1)}', space=vmem, size = 0x200, scoped, tag = 'scoped memory for pinn_forward.1']
  %s0 = inlined_call_operand.vmem [shape: f32[8,384], index: 0, kind: input, shape index: {}]
  %s1 = inlined_call_operand.vmem [shape: f32[128,8], index: 1, kind: input, shape index: {}]
  %s2 = inlined_call_operand.vmem [shape: f32[128,1], index: 2, kind: input, shape index: {}]
  %s3 = inlined_call_operand.vmem [shape: f32[64,128], index: 3, kind: input, shape index: {}]
  %s4 = inlined_call_operand.vmem [shape: f32[64,1], index: 4, kind: input, shape index: {}]
  %s5 = inlined_call_operand.vmem [shape: f32[1,64], index: 5, kind: input, shape index: {}]
  %s6 = inlined_call_operand.<no memory space> [shape: f32[1,1], index: 6, kind: input, shape index: {}]
  %s7 = inlined_call_operand.vmem [shape: f32[1,384], index: 7, kind: output, shape index: {}]
  %s8 = sld [smem:[#allocation0]]
  $region38: #{pinn_forward.1} parent=0
    _
  %s10 = ssub.s32 1, %s8
  %s11 = scalar_select 0, %s10, %s8
  %v12 = vstv %s6
  %13 = vst [vmem:[#allocation2] sm:$0x1] %v12
  // Predicated region
  $region2: #{pinn_forward.1} parent=0 // pred_check
    _
  $region3: #{pinn_forward.1} parent=0 // pred_check_branch
    %15 = sbr.rel (0) target = $region5
  $region4: #{pinn_forward.1} parent=0 // pred_region
    _
  $region5: #{pinn_forward.1} parent=0 // pred_fallthru
    _
  // Predicated region
  $region6: #{pinn_forward.1} parent=0 // pred_check
    _
  $region7: #{pinn_forward.1} parent=0 // pred_check_branch
    %17 = sbr.rel (0) target = $region9
  $region8: #{pinn_forward.1} parent=0 // pred_region
    _
  $region9: #{pinn_forward.1} parent=0 // pred_fallthru
    _
  // Predicated region
  $region10: #{pinn_forward.1} parent=0 // pred_check
    _
  $region11: #{pinn_forward.1} parent=0 // pred_check_branch
    %19 = sbr.rel (0) target = $region13
  $region12: #{pinn_forward.1} parent=0 // pred_region
    _
  $region13: #{pinn_forward.1} parent=0 // pred_fallthru
    _
  // Predicated region
  $region14: #{pinn_forward.1} parent=0 // pred_check
    _
  $region15: #{pinn_forward.1} parent=0 // pred_check_branch
    %21 = sbr.rel (0) target = $region17
  $region16: #{pinn_forward.1} parent=0 // pred_region
    _
  $region17: #{pinn_forward.1} parent=0 // pred_fallthru
    _
  // Predicated region
  $region18: #{pinn_forward.1} parent=0 // pred_check
    _
  $region19: #{pinn_forward.1} parent=0 // pred_check_branch
    %23 = sbr.rel (0) target = $region21
  $region20: #{pinn_forward.1} parent=0 // pred_region
    _
  $region21: #{pinn_forward.1} parent=0 // pred_fallthru
    _
  // Predicated region
  $region22: #{pinn_forward.1} parent=0 // pred_check
    _
  $region23: #{pinn_forward.1} parent=0 // pred_check_branch
    %25 = sbr.rel (0) target = $region25
  $region24: #{pinn_forward.1} parent=0 // pred_region
    _
  $region25: #{pinn_forward.1} parent=0 // pred_fallthru
    _
  // Predicated region
  $region26: #{pinn_forward.1} parent=0 // pred_check
    _
  $region27: #{pinn_forward.1} parent=0 // pred_check_branch
    %27 = sbr.rel (0) target = $region29
  $region28: #{pinn_forward.1} parent=0 // pred_region
    _
  $region29: #{pinn_forward.1} parent=0 // pred_fallthru
    _
  %v28 = vld [vmem:[%s0] sm:$0xff]
  %v29 = vld [vmem:[%s0 + $0x8] sm:$0xff]
  %v30 = vld [vmem:[%s0 + $0x10] sm:$0xff]
  %v31 = vld [vmem:[%s1] sm:$0xff]
  %v32 = vld [vmem:[%s1 + $0x8] sm:$0xff]
  %v33 = vld [vmem:[%s1 + $0x10] sm:$0xff]
  %v34 = vld [vmem:[%s1 + $0x18] sm:$0xff]
  %v35 = vld [vmem:[%s1 + $0x20] sm:$0xff]
  %v36 = vld [vmem:[%s1 + $0x28] sm:$0xff]
  %v37 = vld [vmem:[%s1 + $0x30] sm:$0xff]
  %v38 = vld [vmem:[%s1 + $0x38] sm:$0xff]
  %v39 = vld [vmem:[%s1 + $0x40] sm:$0xff]
  %v40 = vld [vmem:[%s1 + $0x48] sm:$0xff]
  %v41 = vld [vmem:[%s1 + $0x50] sm:$0xff]
  %v42 = vld [vmem:[%s1 + $0x58] sm:$0xff]
  %v43 = vld [vmem:[%s1 + $0x60] sm:$0xff]
  %v44 = vld [vmem:[%s1 + $0x68] sm:$0xff]
  %v45 = vld [vmem:[%s1 + $0x70] sm:$0xff]
  %v46 = vld [vmem:[%s1 + $0x78] sm:$0xff]
  %v47 = vld [vmem:[%s2] sm:$0xff]
  %v48 = vld [vmem:[%s2 + $0x8] sm:$0xff]
  %v49 = vld [vmem:[%s2 + $0x10] sm:$0xff]
  %v50 = vld [vmem:[%s2 + $0x18] sm:$0xff]
  %v51 = vld [vmem:[%s2 + $0x20] sm:$0xff]
  %v52 = vld [vmem:[%s2 + $0x28] sm:$0xff]
  %v53 = vld [vmem:[%s2 + $0x30] sm:$0xff]
  %v54 = vld [vmem:[%s2 + $0x38] sm:$0xff]
  %v55 = vld [vmem:[%s2 + $0x40] sm:$0xff]
  %v56 = vld [vmem:[%s2 + $0x48] sm:$0xff]
  %v57 = vld [vmem:[%s2 + $0x50] sm:$0xff]
  %v58 = vld [vmem:[%s2 + $0x58] sm:$0xff]
  %v59 = vld [vmem:[%s2 + $0x60] sm:$0xff]
  %v60 = vld [vmem:[%s2 + $0x68] sm:$0xff]
  %v61 = vld [vmem:[%s2 + $0x70] sm:$0xff]
  %v62 = vld [vmem:[%s2 + $0x78] sm:$0xff]
  %64 = vset.pattern.permute.xlu0 0
  %65 = vperm.xlu0 %64, %v47
  %v66 = vpop.permute.xlu0 %65
  %69 = vset.pattern.permute.xlu0 0
  %70 = vperm.xlu0 %69, %v48
  %v71 = vpop.permute.xlu0 %70
  %74 = vset.pattern.permute.xlu0 0
  %75 = vperm.xlu0 %74, %v49
  %v76 = vpop.permute.xlu0 %75
  %79 = vset.pattern.permute.xlu0 0
  %80 = vperm.xlu0 %79, %v50
  %v81 = vpop.permute.xlu0 %80
  %84 = vset.pattern.permute.xlu0 0
  %85 = vperm.xlu0 %84, %v51
  %v86 = vpop.permute.xlu0 %85
  %89 = vset.pattern.permute.xlu0 0
  %90 = vperm.xlu0 %89, %v52
  %v91 = vpop.permute.xlu0 %90
  %94 = vset.pattern.permute.xlu0 0
  %95 = vperm.xlu0 %94, %v53
  %v96 = vpop.permute.xlu0 %95
  %99 = vset.pattern.permute.xlu0 0
  %100 = vperm.xlu0 %99, %v54
  %v101 = vpop.permute.xlu0 %100
  %104 = vset.pattern.permute.xlu0 0
  %105 = vperm.xlu0 %104, %v55
  %v106 = vpop.permute.xlu0 %105
  %109 = vset.pattern.permute.xlu0 0
  %110 = vperm.xlu0 %109, %v56
  %v111 = vpop.permute.xlu0 %110
  %114 = vset.pattern.permute.xlu0 0
  %115 = vperm.xlu0 %114, %v57
  %v116 = vpop.permute.xlu0 %115
  %119 = vset.pattern.permute.xlu0 0
  %120 = vperm.xlu0 %119, %v58
  %v121 = vpop.permute.xlu0 %120
  %124 = vset.pattern.permute.xlu0 0
  %125 = vperm.xlu0 %124, %v59
  %v126 = vpop.permute.xlu0 %125
  %129 = vset.pattern.permute.xlu0 0
  %130 = vperm.xlu0 %129, %v60
  %v131 = vpop.permute.xlu0 %130
  %134 = vset.pattern.permute.xlu0 0
  %135 = vperm.xlu0 %134, %v61
  %v136 = vpop.permute.xlu0 %135
  %139 = vset.pattern.permute.xlu0 0
  %140 = vperm.xlu0 %139, %v62
  %v141 = vpop.permute.xlu0 %140
  %vm143 = vcmask 64512
  %v145 = vsel %vm143, %v31, 0
  %v148 = vsel %vm143, %v32, 0
  %v151 = vsel %vm143, %v33, 0
  %v154 = vsel %vm143, %v34, 0
  %v157 = vsel %vm143, %v35, 0
  %v160 = vsel %vm143, %v36, 0
  %v163 = vsel %vm143, %v37, 0
  %v166 = vsel %vm143, %v38, 0
  %v169 = vsel %vm143, %v39, 0
  %v172 = vsel %vm143, %v40, 0
  %v175 = vsel %vm143, %v41, 0
  %v178 = vsel %vm143, %v42, 0
  %v181 = vsel %vm143, %v43, 0
  %v184 = vsel %vm143, %v44, 0
  %v187 = vsel %vm143, %v45, 0
  %v190 = vsel %vm143, %v46, 0
  %192 = vmatpush.msra.mxu0 0.0
  %193 = vmatpush.msra.mxu0 0.0
  %194 = vmatpush.msra.mxu0 0.0
  %195 = vmatpush.msra.mxu0 0.0
  %196 = vmatpush.msra.mxu0 0.0
  %197 = vmatpush.msra.mxu0 0.0
  %198 = vmatpush.msra.mxu0 0.0
  %199 = vmatpush.msra.mxu0 0.0
  %200 = vmatpush.msra.mxu0 0.0
  %201 = vmatpush.msra.mxu0 0.0
  %202 = vmatpush.msra.mxu0 0.0
  %203 = vmatpush.msra.mxu0 0.0
  %204 = vmatpush.msra.mxu0 0.0
  %205 = vmatpush.msra.mxu0 0.0
  %206 = vmatpush.msra.mxu0 0.0
  %207 = vmatpush.msra.mxu0 %v28
  %208 = vmatmul.f32.gmra.mxu0 %v145
  %v209 = vpop.f32.mrf.mxu0
  %v210 = vadd.f32 %v66, %v209
  %211 = vmatmul.f32.gmra.mxu0 %v148
  %v212 = vpop.f32.mrf.mxu0
  %v213 = vadd.f32 %v71, %v212
  %214 = vmatmul.f32.gmra.mxu0 %v151
  %v215 = vpop.f32.mrf.mxu0
  %v216 = vadd.f32 %v76, %v215
  %217 = vmatmul.f32.gmra.mxu0 %v154
  %v218 = vpop.f32.mrf.mxu0
  %v219 = vadd.f32 %v81, %v218
  %220 = vmatmul.f32.gmra.mxu0 %v157
  %v221 = vpop.f32.mrf.mxu0
  %v222 = vadd.f32 %v86, %v221
  %223 = vmatmul.f32.gmra.mxu0 %v160
  %v224 = vpop.f32.mrf.mxu0
  %v225 = vadd.f32 %v91, %v224
  %226 = vmatmul.f32.gmra.mxu0 %v163
  %v227 = vpop.f32.mrf.mxu0
  %v228 = vadd.f32 %v96, %v227
  %229 = vmatmul.f32.gmra.mxu0 %v166
  %v230 = vpop.f32.mrf.mxu0
  %v231 = vadd.f32 %v101, %v230
  %232 = vmatmul.f32.gmra.mxu0 %v169
  %v233 = vpop.f32.mrf.mxu0
  %v234 = vadd.f32 %v106, %v233
  %235 = vmatmul.f32.gmra.mxu0 %v172
  %v236 = vpop.f32.mrf.mxu0
  %v237 = vadd.f32 %v111, %v236
  %238 = vmatmul.f32.gmra.mxu0 %v175
  %v239 = vpop.f32.mrf.mxu0
  %v240 = vadd.f32 %v116, %v239
  %241 = vmatmul.f32.gmra.mxu0 %v178
  %v242 = vpop.f32.mrf.mxu0
  %v243 = vadd.f32 %v121, %v242
  %244 = vmatmul.f32.gmra.mxu0 %v181
  %v245 = vpop.f32.mrf.mxu0
  %v246 = vadd.f32 %v126, %v245
  %247 = vmatmul.f32.gmra.mxu0 %v184
  %v248 = vpop.f32.mrf.mxu0
  %v249 = vadd.f32 %v131, %v248
  %250 = vmatmul.f32.gmra.mxu0 %v187
  %v251 = vpop.f32.mrf.mxu0
  %v252 = vadd.f32 %v136, %v251
  %253 = vmatmul.f32.gmra.mxu0 %v190
  %v254 = vpop.f32.mrf.mxu0
  %v255 = vadd.f32 %v141, %v254
  %256 = vdwg.mxu0
  %257 = vmatpush.msra.mxu0 0.0
  %258 = vmatpush.msra.mxu0 0.0
  %259 = vmatpush.msra.mxu0 0.0
  %260 = vmatpush.msra.mxu0 0.0
  %261 = vmatpush.msra.mxu0 0.0
  %262 = vmatpush.msra.mxu0 0.0
  %263 = vmatpush.msra.mxu0 0.0
  %264 = vmatpush.msra.mxu0 0.0
  %265 = vmatpush.msra.mxu0 0.0
  %266 = vmatpush.msra.mxu0 0.0
  %267 = vmatpush.msra.mxu0 0.0
  %268 = vmatpush.msra.mxu0 0.0
  %269 = vmatpush.msra.mxu0 0.0
  %270 = vmatpush.msra.mxu0 0.0
  %271 = vmatpush.msra.mxu0 0.0
  %272 = vmatpush.msra.mxu0 %v29
  %273 = vmatmul.f32.gmra.mxu0 %v145
  %v274 = vpop.f32.mrf.mxu0
  %v275 = vadd.f32 %v66, %v274
  %276 = vmatmul.f32.gmra.mxu0 %v148
  %v277 = vpop.f32.mrf.mxu0
  %v278 = vadd.f32 %v71, %v277
  %279 = vmatmul.f32.gmra.mxu0 %v151
  %v280 = vpop.f32.mrf.mxu0
  %v281 = vadd.f32 %v76, %v280
  %282 = vmatmul.f32.gmra.mxu0 %v154
  %v283 = vpop.f32.mrf.mxu0
  %v284 = vadd.f32 %v81, %v283
  %285 = vmatmul.f32.gmra.mxu0 %v157
  %v286 = vpop.f32.mrf.mxu0
  %v287 = vadd.f32 %v86, %v286
  %288 = vmatmul.f32.gmra.mxu0 %v160
  %v289 = vpop.f32.mrf.mxu0
  %v290 = vadd.f32 %v91, %v289
  %291 = vmatmul.f32.gmra.mxu0 %v163
  %v292 = vpop.f32.mrf.mxu0
  %v293 = vadd.f32 %v96, %v292
  %294 = vmatmul.f32.gmra.mxu0 %v166
  %v295 = vpop.f32.mrf.mxu0
  %v296 = vadd.f32 %v101, %v295
  %297 = vmatmul.f32.gmra.mxu0 %v169
  %v298 = vpop.f32.mrf.mxu0
  %v299 = vadd.f32 %v106, %v298
  %300 = vmatmul.f32.gmra.mxu0 %v172
  %v301 = vpop.f32.mrf.mxu0
  %v302 = vadd.f32 %v111, %v301
  %303 = vmatmul.f32.gmra.mxu0 %v175
  %v304 = vpop.f32.mrf.mxu0
  %v305 = vadd.f32 %v116, %v304
  %306 = vmatmul.f32.gmra.mxu0 %v178
  %v307 = vpop.f32.mrf.mxu0
  %v308 = vadd.f32 %v121, %v307
  %309 = vmatmul.f32.gmra.mxu0 %v181
  %v310 = vpop.f32.mrf.mxu0
  %v311 = vadd.f32 %v126, %v310
  %312 = vmatmul.f32.gmra.mxu0 %v184
  %v313 = vpop.f32.mrf.mxu0
  %v314 = vadd.f32 %v131, %v313
  %315 = vmatmul.f32.gmra.mxu0 %v187
  %v316 = vpop.f32.mrf.mxu0
  %v317 = vadd.f32 %v136, %v316
  %318 = vmatmul.f32.gmra.mxu0 %v190
  %v319 = vpop.f32.mrf.mxu0
  %v320 = vadd.f32 %v141, %v319
  %321 = vdwg.mxu0
  %322 = vmatpush.msra.mxu0 0.0
  %323 = vmatpush.msra.mxu0 0.0
  %324 = vmatpush.msra.mxu0 0.0
  %325 = vmatpush.msra.mxu0 0.0
  %326 = vmatpush.msra.mxu0 0.0
  %327 = vmatpush.msra.mxu0 0.0
  %328 = vmatpush.msra.mxu0 0.0
  %329 = vmatpush.msra.mxu0 0.0
  %330 = vmatpush.msra.mxu0 0.0
  %331 = vmatpush.msra.mxu0 0.0
  %332 = vmatpush.msra.mxu0 0.0
  %333 = vmatpush.msra.mxu0 0.0
  %334 = vmatpush.msra.mxu0 0.0
  %335 = vmatpush.msra.mxu0 0.0
  %336 = vmatpush.msra.mxu0 0.0
  %337 = vmatpush.msra.mxu0 %v30
  %338 = vmatmul.f32.gmra.mxu0 %v145
  %v339 = vpop.f32.mrf.mxu0
  %v340 = vadd.f32 %v66, %v339
  %341 = vmatmul.f32.gmra.mxu0 %v148
  %v342 = vpop.f32.mrf.mxu0
  %v343 = vadd.f32 %v71, %v342
  %344 = vmatmul.f32.gmra.mxu0 %v151
  %v345 = vpop.f32.mrf.mxu0
  %v346 = vadd.f32 %v76, %v345
  %347 = vmatmul.f32.gmra.mxu0 %v154
  %v348 = vpop.f32.mrf.mxu0
  %v349 = vadd.f32 %v81, %v348
  %350 = vmatmul.f32.gmra.mxu0 %v157
  %v351 = vpop.f32.mrf.mxu0
  %v352 = vadd.f32 %v86, %v351
  %353 = vmatmul.f32.gmra.mxu0 %v160
  %v354 = vpop.f32.mrf.mxu0
  %v355 = vadd.f32 %v91, %v354
  %356 = vmatmul.f32.gmra.mxu0 %v163
  %v357 = vpop.f32.mrf.mxu0
  %v358 = vadd.f32 %v96, %v357
  %359 = vmatmul.f32.gmra.mxu0 %v166
  %v360 = vpop.f32.mrf.mxu0
  %v361 = vadd.f32 %v101, %v360
  %362 = vmatmul.f32.gmra.mxu0 %v169
  %v363 = vpop.f32.mrf.mxu0
  %v364 = vadd.f32 %v106, %v363
  %365 = vmatmul.f32.gmra.mxu0 %v172
  %v366 = vpop.f32.mrf.mxu0
  %v367 = vadd.f32 %v111, %v366
  %368 = vmatmul.f32.gmra.mxu0 %v175
  %v369 = vpop.f32.mrf.mxu0
  %v370 = vadd.f32 %v116, %v369
  %371 = vmatmul.f32.gmra.mxu0 %v178
  %v372 = vpop.f32.mrf.mxu0
  %v373 = vadd.f32 %v121, %v372
  %374 = vmatmul.f32.gmra.mxu0 %v181
  %v375 = vpop.f32.mrf.mxu0
  %v376 = vadd.f32 %v126, %v375
  %377 = vmatmul.f32.gmra.mxu0 %v184
  %v378 = vpop.f32.mrf.mxu0
  %v379 = vadd.f32 %v131, %v378
  %380 = vmatmul.f32.gmra.mxu0 %v187
  %v381 = vpop.f32.mrf.mxu0
  %v382 = vadd.f32 %v136, %v381
  %383 = vmatmul.f32.gmra.mxu0 %v190
  %v384 = vpop.f32.mrf.mxu0
  %v385 = vadd.f32 %v141, %v384
  %386 = vdwg.mxu0
  %v387 = vxor.u32 %v210, 2147483648
  %v388 = vxor.u32 %v275, 2147483648
  %v389 = vxor.u32 %v340, 2147483648
  %v390 = vxor.u32 %v213, 2147483648
  %v391 = vxor.u32 %v278, 2147483648
  %v392 = vxor.u32 %v343, 2147483648
  %v393 = vxor.u32 %v216, 2147483648
  %v394 = vxor.u32 %v281, 2147483648
  %v395 = vxor.u32 %v346, 2147483648
  %v396 = vxor.u32 %v219, 2147483648
  %v397 = vxor.u32 %v284, 2147483648
  %v398 = vxor.u32 %v349, 2147483648
  %v399 = vxor.u32 %v222, 2147483648
  %v400 = vxor.u32 %v287, 2147483648
  %v401 = vxor.u32 %v352, 2147483648
  %v402 = vxor.u32 %v225, 2147483648
  %v403 = vxor.u32 %v290, 2147483648
  %v404 = vxor.u32 %v355, 2147483648
  %v405 = vxor.u32 %v228, 2147483648
  %v406 = vxor.u32 %v293, 2147483648
  %v407 = vxor.u32 %v358, 2147483648
  %v408 = vxor.u32 %v231, 2147483648
  %v409 = vxor.u32 %v296, 2147483648
  %v410 = vxor.u32 %v361, 2147483648
  %v411 = vxor.u32 %v234, 2147483648
  %v412 = vxor.u32 %v299, 2147483648
  %v413 = vxor.u32 %v364, 2147483648
  %v414 = vxor.u32 %v237, 2147483648
  %v415 = vxor.u32 %v302, 2147483648
  %v416 = vxor.u32 %v367, 2147483648
  %v417 = vxor.u32 %v240, 2147483648
  %v418 = vxor.u32 %v305, 2147483648
  %v419 = vxor.u32 %v370, 2147483648
  %v420 = vxor.u32 %v243, 2147483648
  %v421 = vxor.u32 %v308, 2147483648
  %v422 = vxor.u32 %v373, 2147483648
  %v423 = vxor.u32 %v246, 2147483648
  %v424 = vxor.u32 %v311, 2147483648
  %v425 = vxor.u32 %v376, 2147483648
  %v426 = vxor.u32 %v249, 2147483648
  %v427 = vxor.u32 %v314, 2147483648
  %v428 = vxor.u32 %v379, 2147483648
  %v429 = vxor.u32 %v252, 2147483648
  %v430 = vxor.u32 %v317, 2147483648
  %v431 = vxor.u32 %v382, 2147483648
  %v432 = vxor.u32 %v255, 2147483648
  %v433 = vxor.u32 %v320, 2147483648
  %v434 = vxor.u32 %v385, 2147483648
  %v435 = vmul.f32 %v387, 1.442695
  %v436 = vpow.pop %v435
  %v437 = vmul.f32 %v388, 1.442695
  %v438 = vpow.pop %v437
  %v439 = vmul.f32 %v389, 1.442695
  %v440 = vpow.pop %v439
  %v441 = vmul.f32 %v390, 1.442695
  %v442 = vpow.pop %v441
  %v443 = vmul.f32 %v391, 1.442695
  %v444 = vpow.pop %v443
  %v445 = vmul.f32 %v392, 1.442695
  %v446 = vpow.pop %v445
  %v447 = vmul.f32 %v393, 1.442695
  %v448 = vpow.pop %v447
  %v449 = vmul.f32 %v394, 1.442695
  %v450 = vpow.pop %v449
  %v451 = vmul.f32 %v395, 1.442695
  %v452 = vpow.pop %v451
  %v453 = vmul.f32 %v396, 1.442695
  %v454 = vpow.pop %v453
  %v455 = vmul.f32 %v397, 1.442695
  %v456 = vpow.pop %v455
  %v457 = vmul.f32 %v398, 1.442695
  %v458 = vpow.pop %v457
  %v459 = vmul.f32 %v399, 1.442695
  %v460 = vpow.pop %v459
  %v461 = vmul.f32 %v400, 1.442695
  %v462 = vpow.pop %v461
  %v463 = vmul.f32 %v401, 1.442695
  %v464 = vpow.pop %v463
  %v465 = vmul.f32 %v402, 1.442695
  %v466 = vpow.pop %v465
  %v467 = vmul.f32 %v403, 1.442695
  %v468 = vpow.pop %v467
  %v469 = vmul.f32 %v404, 1.442695
  %v470 = vpow.pop %v469
  %v471 = vmul.f32 %v405, 1.442695
  %v472 = vpow.pop %v471
  %v473 = vmul.f32 %v406, 1.442695
  %v474 = vpow.pop %v473
  %v475 = vmul.f32 %v407, 1.442695
  %v476 = vpow.pop %v475
  %v477 = vmul.f32 %v408, 1.442695
  %v478 = vpow.pop %v477
  %v479 = vmul.f32 %v409, 1.442695
  %v480 = vpow.pop %v479
  %v481 = vmul.f32 %v410, 1.442695
  %v482 = vpow.pop %v481
  %v483 = vmul.f32 %v411, 1.442695
  %v484 = vpow.pop %v483
  %v485 = vmul.f32 %v412, 1.442695
  %v486 = vpow.pop %v485
  %v487 = vmul.f32 %v413, 1.442695
  %v488 = vpow.pop %v487
  %v489 = vmul.f32 %v414, 1.442695
  %v490 = vpow.pop %v489
  %v491 = vmul.f32 %v415, 1.442695
  %v492 = vpow.pop %v491
  %v493 = vmul.f32 %v416, 1.442695
  %v494 = vpow.pop %v493
  %v495 = vmul.f32 %v417, 1.442695
  %v496 = vpow.pop %v495
  %v497 = vmul.f32 %v418, 1.442695
  %v498 = vpow.pop %v497
  %v499 = vmul.f32 %v419, 1.442695
  %v500 = vpow.pop %v499
  %v501 = vmul.f32 %v420, 1.442695
  %v502 = vpow.pop %v501
  %v503 = vmul.f32 %v421, 1.442695
  %v504 = vpow.pop %v503
  %v505 = vmul.f32 %v422, 1.442695
  %v506 = vpow.pop %v505
  %v507 = vmul.f32 %v423, 1.442695
  %v508 = vpow.pop %v507
  %v509 = vmul.f32 %v424, 1.442695
  %v510 = vpow.pop %v509
  %v511 = vmul.f32 %v425, 1.442695
  %v512 = vpow.pop %v511
  %v513 = vmul.f32 %v426, 1.442695
  %v514 = vpow.pop %v513
  %v515 = vmul.f32 %v427, 1.442695
  %v516 = vpow.pop %v515
  %v517 = vmul.f32 %v428, 1.442695
  %v518 = vpow.pop %v517
  %v519 = vmul.f32 %v429, 1.442695
  %v520 = vpow.pop %v519
  %v521 = vmul.f32 %v430, 1.442695
  %v522 = vpow.pop %v521
  %v523 = vmul.f32 %v431, 1.442695
  %v524 = vpow.pop %v523
  %v525 = vmul.f32 %v432, 1.442695
  %v526 = vpow.pop %v525
  %v527 = vmul.f32 %v433, 1.442695
  %v528 = vpow.pop %v527
  %v529 = vmul.f32 %v434, 1.442695
  %v530 = vpow.pop %v529
  %v531 = vadd.f32 %v436, 1.0
  %v532 = vadd.f32 %v438, 1.0
  %v533 = vadd.f32 %v440, 1.0
  %v534 = vadd.f32 %v442, 1.0
  %v535 = vadd.f32 %v444, 1.0
  %v536 = vadd.f32 %v446, 1.0
  %v537 = vadd.f32 %v448, 1.0
  %v538 = vadd.f32 %v450, 1.0
  %v539 = vadd.f32 %v452, 1.0
  %v540 = vadd.f32 %v454, 1.0
  %v541 = vadd.f32 %v456, 1.0
  %v542 = vadd.f32 %v458, 1.0
  %v543 = vadd.f32 %v460, 1.0
  %v544 = vadd.f32 %v462, 1.0
  %v545 = vadd.f32 %v464, 1.0
  %v546 = vadd.f32 %v466, 1.0
  %v547 = vadd.f32 %v468, 1.0
  %v548 = vadd.f32 %v470, 1.0
  %v549 = vadd.f32 %v472, 1.0
  %v550 = vadd.f32 %v474, 1.0
  %v551 = vadd.f32 %v476, 1.0
  %v552 = vadd.f32 %v478, 1.0
  %v553 = vadd.f32 %v480, 1.0
  %v554 = vadd.f32 %v482, 1.0
  %v555 = vadd.f32 %v484, 1.0
  %v556 = vadd.f32 %v486, 1.0
  %v557 = vadd.f32 %v488, 1.0
  %v558 = vadd.f32 %v490, 1.0
  %v559 = vadd.f32 %v492, 1.0
  %v560 = vadd.f32 %v494, 1.0
  %v561 = vadd.f32 %v496, 1.0
  %v562 = vadd.f32 %v498, 1.0
  %v563 = vadd.f32 %v500, 1.0
  %v564 = vadd.f32 %v502, 1.0
  %v565 = vadd.f32 %v504, 1.0
  %v566 = vadd.f32 %v506, 1.0
  %v567 = vadd.f32 %v508, 1.0
  %v568 = vadd.f32 %v510, 1.0
  %v569 = vadd.f32 %v512, 1.0
  %v570 = vadd.f32 %v514, 1.0
  %v571 = vadd.f32 %v516, 1.0
  %v572 = vadd.f32 %v518, 1.0
  %v573 = vadd.f32 %v520, 1.0
  %v574 = vadd.f32 %v522, 1.0
  %v575 = vadd.f32 %v524, 1.0
  %v576 = vadd.f32 %v526, 1.0
  %v577 = vadd.f32 %v528, 1.0
  %v578 = vadd.f32 %v530, 1.0
  %v579 = vrcp.pop %v531
  %v580 = vmul.f32 %v531, %v579
  %v581 = vsub.f32 1.0, %v580
  %v582 = vmul.f32 %v579, %v581
  %v583 = vadd.f32 %v579, %v582
  %vm584 = vweird.f32 %v531
  %vm585 = vweird.f32 %v579
  %vm586 = vmor %vm584, %vm585
  %v587 = vsel %vm586, %v579, %v583
  %v588 = vand.u32 2147483647, %v531
  %vm589 = vcmp.eq.f32.partialorder %v588, 8.507059e+37
  %v590 = vand.u32 %v531, 2147483648
  %v591 = vor.u32 1.1754944e-38, %v590
  %v592 = vsel %vm589, %v591, %v587
  %v593 = vmul.f32 1.0, %v592
  %v594 = vrcp.pop %v532
  %v595 = vmul.f32 %v532, %v594
  %v596 = vsub.f32 1.0, %v595
  %v597 = vmul.f32 %v594, %v596
  %v598 = vadd.f32 %v594, %v597
  %vm599 = vweird.f32 %v532
  %vm600 = vweird.f32 %v594
  %vm601 = vmor %vm599, %vm600
  %v602 = vsel %vm601, %v594, %v598
  %v603 = vand.u32 2147483647, %v532
  %vm604 = vcmp.eq.f32.partialorder %v603, 8.507059e+37
  %v605 = vand.u32 %v532, 2147483648
  %v606 = vor.u32 1.1754944e-38, %v605
  %v607 = vsel %vm604, %v606, %v602
  %v608 = vmul.f32 1.0, %v607
  %v609 = vrcp.pop %v533
  %v610 = vmul.f32 %v533, %v609
  %v611 = vsub.f32 1.0, %v610
  %v612 = vmul.f32 %v609, %v611
  %v613 = vadd.f32 %v609, %v612
  %vm614 = vweird.f32 %v533
  %vm615 = vweird.f32 %v609
  %vm616 = vmor %vm614, %vm615
  %v617 = vsel %vm616, %v609, %v613
  %v618 = vand.u32 2147483647, %v533
  %vm619 = vcmp.eq.f32.partialorder %v618, 8.507059e+37
  %v620 = vand.u32 %v533, 2147483648
  %v621 = vor.u32 1.1754944e-38, %v620
  %v622 = vsel %vm619, %v621, %v617
  %v623 = vmul.f32 1.0, %v622
  %v624 = vrcp.pop %v534
  %v625 = vmul.f32 %v534, %v624
  %v626 = vsub.f32 1.0, %v625
  %v627 = vmul.f32 %v624, %v626
  %v628 = vadd.f32 %v624, %v627
  %vm629 = vweird.f32 %v534
  %vm630 = vweird.f32 %v624
  %vm631 = vmor %vm629, %vm630
  %v632 = vsel %vm631, %v624, %v628
  %v633 = vand.u32 2147483647, %v534
  %vm634 = vcmp.eq.f32.partialorder %v633, 8.507059e+37
  %v635 = vand.u32 %v534, 2147483648
  %v636 = vor.u32 1.1754944e-38, %v635
  %v637 = vsel %vm634, %v636, %v632
  %v638 = vmul.f32 1.0, %v637
  %v639 = vrcp.pop %v535
  %v640 = vmul.f32 %v535, %v639
  %v641 = vsub.f32 1.0, %v640
  %v642 = vmul.f32 %v639, %v641
  %v643 = vadd.f32 %v639, %v642
  %vm644 = vweird.f32 %v535
  %vm645 = vweird.f32 %v639
  %vm646 = vmor %vm644, %vm645
  %v647 = vsel %vm646, %v639, %v643
  %v648 = vand.u32 2147483647, %v535
  %vm649 = vcmp.eq.f32.partialorder %v648, 8.507059e+37
  %v650 = vand.u32 %v535, 2147483648
  %v651 = vor.u32 1.1754944e-38, %v650
  %v652 = vsel %vm649, %v651, %v647
  %v653 = vmul.f32 1.0, %v652
  %v654 = vrcp.pop %v536
  %v655 = vmul.f32 %v536, %v654
  %v656 = vsub.f32 1.0, %v655
  %v657 = vmul.f32 %v654, %v656
  %v658 = vadd.f32 %v654, %v657
  %vm659 = vweird.f32 %v536
  %vm660 = vweird.f32 %v654
  %vm661 = vmor %vm659, %vm660
  %v662 = vsel %vm661, %v654, %v658
  %v663 = vand.u32 2147483647, %v536
  %vm664 = vcmp.eq.f32.partialorder %v663, 8.507059e+37
  %v665 = vand.u32 %v536, 2147483648
  %v666 = vor.u32 1.1754944e-38, %v665
  %v667 = vsel %vm664, %v666, %v662
  %v668 = vmul.f32 1.0, %v667
  %v669 = vrcp.pop %v537
  %v670 = vmul.f32 %v537, %v669
  %v671 = vsub.f32 1.0, %v670
  %v672 = vmul.f32 %v669, %v671
  %v673 = vadd.f32 %v669, %v672
  %vm674 = vweird.f32 %v537
  %vm675 = vweird.f32 %v669
  %vm676 = vmor %vm674, %vm675
  %v677 = vsel %vm676, %v669, %v673
  %v678 = vand.u32 2147483647, %v537
  %vm679 = vcmp.eq.f32.partialorder %v678, 8.507059e+37
  %v680 = vand.u32 %v537, 2147483648
  %v681 = vor.u32 1.1754944e-38, %v680
  %v682 = vsel %vm679, %v681, %v677
  %v683 = vmul.f32 1.0, %v682
  %v684 = vrcp.pop %v538
  %v685 = vmul.f32 %v538, %v684
  %v686 = vsub.f32 1.0, %v685
  %v687 = vmul.f32 %v684, %v686
  %v688 = vadd.f32 %v684, %v687
  %vm689 = vweird.f32 %v538
  %vm690 = vweird.f32 %v684
  %vm691 = vmor %vm689, %vm690
  %v692 = vsel %vm691, %v684, %v688
  %v693 = vand.u32 2147483647, %v538
  %vm694 = vcmp.eq.f32.partialorder %v693, 8.507059e+37
  %v695 = vand.u32 %v538, 2147483648
  %v696 = vor.u32 1.1754944e-38, %v695
  %v697 = vsel %vm694, %v696, %v692
  %v698 = vmul.f32 1.0, %v697
  %v699 = vrcp.pop %v539
  %v700 = vmul.f32 %v539, %v699
  %v701 = vsub.f32 1.0, %v700
  %v702 = vmul.f32 %v699, %v701
  %v703 = vadd.f32 %v699, %v702
  %vm704 = vweird.f32 %v539
  %vm705 = vweird.f32 %v699
  %vm706 = vmor %vm704, %vm705
  %v707 = vsel %vm706, %v699, %v703
  %v708 = vand.u32 2147483647, %v539
  %vm709 = vcmp.eq.f32.partialorder %v708, 8.507059e+37
  %v710 = vand.u32 %v539, 2147483648
  %v711 = vor.u32 1.1754944e-38, %v710
  %v712 = vsel %vm709, %v711, %v707
  %v713 = vmul.f32 1.0, %v712
  %v714 = vrcp.pop %v540
  %v715 = vmul.f32 %v540, %v714
  %v716 = vsub.f32 1.0, %v715
  %v717 = vmul.f32 %v714, %v716
  %v718 = vadd.f32 %v714, %v717
  %vm719 = vweird.f32 %v540
  %vm720 = vweird.f32 %v714
  %vm721 = vmor %vm719, %vm720
  %v722 = vsel %vm721, %v714, %v718
  %v723 = vand.u32 2147483647, %v540
  %vm724 = vcmp.eq.f32.partialorder %v723, 8.507059e+37
  %v725 = vand.u32 %v540, 2147483648
  %v726 = vor.u32 1.1754944e-38, %v725
  %v727 = vsel %vm724, %v726, %v722
  %v728 = vmul.f32 1.0, %v727
  %v729 = vrcp.pop %v541
  %v730 = vmul.f32 %v541, %v729
  %v731 = vsub.f32 1.0, %v730
  %v732 = vmul.f32 %v729, %v731
  %v733 = vadd.f32 %v729, %v732
  %vm734 = vweird.f32 %v541
  %vm735 = vweird.f32 %v729
  %vm736 = vmor %vm734, %vm735
  %v737 = vsel %vm736, %v729, %v733
  %v738 = vand.u32 2147483647, %v541
  %vm739 = vcmp.eq.f32.partialorder %v738, 8.507059e+37
  %v740 = vand.u32 %v541, 2147483648
  %v741 = vor.u32 1.1754944e-38, %v740
  %v742 = vsel %vm739, %v741, %v737
  %v743 = vmul.f32 1.0, %v742
  %v744 = vrcp.pop %v542
  %v745 = vmul.f32 %v542, %v744
  %v746 = vsub.f32 1.0, %v745
  %v747 = vmul.f32 %v744, %v746
  %v748 = vadd.f32 %v744, %v747
  %vm749 = vweird.f32 %v542
  %vm750 = vweird.f32 %v744
  %vm751 = vmor %vm749, %vm750
  %v752 = vsel %vm751, %v744, %v748
  %v753 = vand.u32 2147483647, %v542
  %vm754 = vcmp.eq.f32.partialorder %v753, 8.507059e+37
  %v755 = vand.u32 %v542, 2147483648
  %v756 = vor.u32 1.1754944e-38, %v755
  %v757 = vsel %vm754, %v756, %v752
  %v758 = vmul.f32 1.0, %v757
  %v759 = vrcp.pop %v543
  %v760 = vmul.f32 %v543, %v759
  %v761 = vsub.f32 1.0, %v760
  %v762 = vmul.f32 %v759, %v761
  %v763 = vadd.f32 %v759, %v762
  %vm764 = vweird.f32 %v543
  %vm765 = vweird.f32 %v759
  %vm766 = vmor %vm764, %vm765
  %v767 = vsel %vm766, %v759, %v763
  %v768 = vand.u32 2147483647, %v543
  %vm769 = vcmp.eq.f32.partialorder %v768, 8.507059e+37
  %v770 = vand.u32 %v543, 2147483648
  %v771 = vor.u32 1.1754944e-38, %v770
  %v772 = vsel %vm769, %v771, %v767
  %v773 = vmul.f32 1.0, %v772
  %v774 = vrcp.pop %v544
  %v775 = vmul.f32 %v544, %v774
  %v776 = vsub.f32 1.0, %v775
  %v777 = vmul.f32 %v774, %v776
  %v778 = vadd.f32 %v774, %v777
  %vm779 = vweird.f32 %v544
  %vm780 = vweird.f32 %v774
  %vm781 = vmor %vm779, %vm780
  %v782 = vsel %vm781, %v774, %v778
  %v783 = vand.u32 2147483647, %v544
  %vm784 = vcmp.eq.f32.partialorder %v783, 8.507059e+37
  %v785 = vand.u32 %v544, 2147483648
  %v786 = vor.u32 1.1754944e-38, %v785
  %v787 = vsel %vm784, %v786, %v782
  %v788 = vmul.f32 1.0, %v787
  %v789 = vrcp.pop %v545
  %v790 = vmul.f32 %v545, %v789
  %v791 = vsub.f32 1.0, %v790
  %v792 = vmul.f32 %v789, %v791
  %v793 = vadd.f32 %v789, %v792
  %vm794 = vweird.f32 %v545
  %vm795 = vweird.f32 %v789
  %vm796 = vmor %vm794, %vm795
  %v797 = vsel %vm796, %v789, %v793
  %v798 = vand.u32 2147483647, %v545
  %vm799 = vcmp.eq.f32.partialorder %v798, 8.507059e+37
  %v800 = vand.u32 %v545, 2147483648
  %v801 = vor.u32 1.1754944e-38, %v800
  %v802 = vsel %vm799, %v801, %v797
  %v803 = vmul.f32 1.0, %v802
  %v804 = vrcp.pop %v546
  %v805 = vmul.f32 %v546, %v804
  %v806 = vsub.f32 1.0, %v805
  %v807 = vmul.f32 %v804, %v806
  %v808 = vadd.f32 %v804, %v807
  %vm809 = vweird.f32 %v546
  %vm810 = vweird.f32 %v804
  %vm811 = vmor %vm809, %vm810
  %v812 = vsel %vm811, %v804, %v808
  %v813 = vand.u32 2147483647, %v546
  %vm814 = vcmp.eq.f32.partialorder %v813, 8.507059e+37
  %v815 = vand.u32 %v546, 2147483648
  %v816 = vor.u32 1.1754944e-38, %v815
  %v817 = vsel %vm814, %v816, %v812
  %v818 = vmul.f32 1.0, %v817
  %v819 = vrcp.pop %v547
  %v820 = vmul.f32 %v547, %v819
  %v821 = vsub.f32 1.0, %v820
  %v822 = vmul.f32 %v819, %v821
  %v823 = vadd.f32 %v819, %v822
  %vm824 = vweird.f32 %v547
  %vm825 = vweird.f32 %v819
  %vm826 = vmor %vm824, %vm825
  %v827 = vsel %vm826, %v819, %v823
  %v828 = vand.u32 2147483647, %v547
  %vm829 = vcmp.eq.f32.partialorder %v828, 8.507059e+37
  %v830 = vand.u32 %v547, 2147483648
  %v831 = vor.u32 1.1754944e-38, %v830
  %v832 = vsel %vm829, %v831, %v827
  %v833 = vmul.f32 1.0, %v832
  %v834 = vrcp.pop %v548
  %v835 = vmul.f32 %v548, %v834
  %v836 = vsub.f32 1.0, %v835
  %v837 = vmul.f32 %v834, %v836
  %v838 = vadd.f32 %v834, %v837
  %vm839 = vweird.f32 %v548
  %vm840 = vweird.f32 %v834
  %vm841 = vmor %vm839, %vm840
  %v842 = vsel %vm841, %v834, %v838
  %v843 = vand.u32 2147483647, %v548
  %vm844 = vcmp.eq.f32.partialorder %v843, 8.507059e+37
  %v845 = vand.u32 %v548, 2147483648
  %v846 = vor.u32 1.1754944e-38, %v845
  %v847 = vsel %vm844, %v846, %v842
  %v848 = vmul.f32 1.0, %v847
  %v849 = vrcp.pop %v549
  %v850 = vmul.f32 %v549, %v849
  %v851 = vsub.f32 1.0, %v850
  %v852 = vmul.f32 %v849, %v851
  %v853 = vadd.f32 %v849, %v852
  %vm854 = vweird.f32 %v549
  %vm855 = vweird.f32 %v849
  %vm856 = vmor %vm854, %vm855
  %v857 = vsel %vm856, %v849, %v853
  %v858 = vand.u32 2147483647, %v549
  %vm859 = vcmp.eq.f32.partialorder %v858, 8.507059e+37
  %v860 = vand.u32 %v549, 2147483648
  %v861 = vor.u32 1.1754944e-38, %v860
  %v862 = vsel %vm859, %v861, %v857
  %v863 = vmul.f32 1.0, %v862
  %v864 = vrcp.pop %v550
  %v865 = vmul.f32 %v550, %v864
  %v866 = vsub.f32 1.0, %v865
  %v867 = vmul.f32 %v864, %v866
  %v868 = vadd.f32 %v864, %v867
  %vm869 = vweird.f32 %v550
  %vm870 = vweird.f32 %v864
  %vm871 = vmor %vm869, %vm870
  %v872 = vsel %vm871, %v864, %v868
  %v873 = vand.u32 2147483647, %v550
  %vm874 = vcmp.eq.f32.partialorder %v873, 8.507059e+37
  %v875 = vand.u32 %v550, 2147483648
  %v876 = vor.u32 1.1754944e-38, %v875
  %v877 = vsel %vm874, %v876, %v872
  %v878 = vmul.f32 1.0, %v877
  %v879 = vrcp.pop %v551
  %v880 = vmul.f32 %v551, %v879
  %v881 = vsub.f32 1.0, %v880
  %v882 = vmul.f32 %v879, %v881
  %v883 = vadd.f32 %v879, %v882
  %vm884 = vweird.f32 %v551
  %vm885 = vweird.f32 %v879
  %vm886 = vmor %vm884, %vm885
  %v887 = vsel %vm886, %v879, %v883
  %v888 = vand.u32 2147483647, %v551
  %vm889 = vcmp.eq.f32.partialorder %v888, 8.507059e+37
  %v890 = vand.u32 %v551, 2147483648
  %v891 = vor.u32 1.1754944e-38, %v890
  %v892 = vsel %vm889, %v891, %v887
  %v893 = vmul.f32 1.0, %v892
  %v894 = vrcp.pop %v552
  %v895 = vmul.f32 %v552, %v894
  %v896 = vsub.f32 1.0, %v895
  %v897 = vmul.f32 %v894, %v896
  %v898 = vadd.f32 %v894, %v897
  %vm899 = vweird.f32 %v552
  %vm900 = vweird.f32 %v894
  %vm901 = vmor %vm899, %vm900
  %v902 = vsel %vm901, %v894, %v898
  %v903 = vand.u32 2147483647, %v552
  %vm904 = vcmp.eq.f32.partialorder %v903, 8.507059e+37
  %v905 = vand.u32 %v552, 2147483648
  %v906 = vor.u32 1.1754944e-38, %v905
  %v907 = vsel %vm904, %v906, %v902
  %v908 = vmul.f32 1.0, %v907
  %v909 = vrcp.pop %v553
  %v910 = vmul.f32 %v553, %v909
  %v911 = vsub.f32 1.0, %v910
  %v912 = vmul.f32 %v909, %v911
  %v913 = vadd.f32 %v909, %v912
  %vm914 = vweird.f32 %v553
  %vm915 = vweird.f32 %v909
  %vm916 = vmor %vm914, %vm915
  %v917 = vsel %vm916, %v909, %v913
  %v918 = vand.u32 2147483647, %v553
  %vm919 = vcmp.eq.f32.partialorder %v918, 8.507059e+37
  %v920 = vand.u32 %v553, 2147483648
  %v921 = vor.u32 1.1754944e-38, %v920
  %v922 = vsel %vm919, %v921, %v917
  %v923 = vmul.f32 1.0, %v922
  %v924 = vrcp.pop %v554
  %v925 = vmul.f32 %v554, %v924
  %v926 = vsub.f32 1.0, %v925
  %v927 = vmul.f32 %v924, %v926
  %v928 = vadd.f32 %v924, %v927
  %vm929 = vweird.f32 %v554
  %vm930 = vweird.f32 %v924
  %vm931 = vmor %vm929, %vm930
  %v932 = vsel %vm931, %v924, %v928
  %v933 = vand.u32 2147483647, %v554
  %vm934 = vcmp.eq.f32.partialorder %v933, 8.507059e+37
  %v935 = vand.u32 %v554, 2147483648
  %v936 = vor.u32 1.1754944e-38, %v935
  %v937 = vsel %vm934, %v936, %v932
  %v938 = vmul.f32 1.0, %v937
  %v939 = vrcp.pop %v555
  %v940 = vmul.f32 %v555, %v939
  %v941 = vsub.f32 1.0, %v940
  %v942 = vmul.f32 %v939, %v941
  %v943 = vadd.f32 %v939, %v942
  %vm944 = vweird.f32 %v555
  %vm945 = vweird.f32 %v939
  %vm946 = vmor %vm944, %vm945
  %v947 = vsel %vm946, %v939, %v943
  %v948 = vand.u32 2147483647, %v555
  %vm949 = vcmp.eq.f32.partialorder %v948, 8.507059e+37
  %v950 = vand.u32 %v555, 2147483648
  %v951 = vor.u32 1.1754944e-38, %v950
  %v952 = vsel %vm949, %v951, %v947
  %v953 = vmul.f32 1.0, %v952
  %v954 = vrcp.pop %v556
  %v955 = vmul.f32 %v556, %v954
  %v956 = vsub.f32 1.0, %v955
  %v957 = vmul.f32 %v954, %v956
  %v958 = vadd.f32 %v954, %v957
  %vm959 = vweird.f32 %v556
  %vm960 = vweird.f32 %v954
  %vm961 = vmor %vm959, %vm960
  %v962 = vsel %vm961, %v954, %v958
  %v963 = vand.u32 2147483647, %v556
  %vm964 = vcmp.eq.f32.partialorder %v963, 8.507059e+37
  %v965 = vand.u32 %v556, 2147483648
  %v966 = vor.u32 1.1754944e-38, %v965
  %v967 = vsel %vm964, %v966, %v962
  %v968 = vmul.f32 1.0, %v967
  %v969 = vrcp.pop %v557
  %v970 = vmul.f32 %v557, %v969
  %v971 = vsub.f32 1.0, %v970
  %v972 = vmul.f32 %v969, %v971
  %v973 = vadd.f32 %v969, %v972
  %vm974 = vweird.f32 %v557
  %vm975 = vweird.f32 %v969
  %vm976 = vmor %vm974, %vm975
  %v977 = vsel %vm976, %v969, %v973
  %v978 = vand.u32 2147483647, %v557
  %vm979 = vcmp.eq.f32.partialorder %v978, 8.507059e+37
  %v980 = vand.u32 %v557, 2147483648
  %v981 = vor.u32 1.1754944e-38, %v980
  %v982 = vsel %vm979, %v981, %v977
  %v983 = vmul.f32 1.0, %v982
  %v984 = vrcp.pop %v558
  %v985 = vmul.f32 %v558, %v984
  %v986 = vsub.f32 1.0, %v985
  %v987 = vmul.f32 %v984, %v986
  %v988 = vadd.f32 %v984, %v987
  %vm989 = vweird.f32 %v558
  %vm990 = vweird.f32 %v984
  %vm991 = vmor %vm989, %vm990
  %v992 = vsel %vm991, %v984, %v988
  %v993 = vand.u32 2147483647, %v558
  %vm994 = vcmp.eq.f32.partialorder %v993, 8.507059e+37
  %v995 = vand.u32 %v558, 2147483648
  %v996 = vor.u32 1.1754944e-38, %v995
  %v997 = vsel %vm994, %v996, %v992
  %v998 = vmul.f32 1.0, %v997
  %v999 = vrcp.pop %v559
  %v1000 = vmul.f32 %v559, %v999
  %v1001 = vsub.f32 1.0, %v1000
  %v1002 = vmul.f32 %v999, %v1001
  %v1003 = vadd.f32 %v999, %v1002
  %vm1004 = vweird.f32 %v559
  %vm1005 = vweird.f32 %v999
  %vm1006 = vmor %vm1004, %vm1005
  %v1007 = vsel %vm1006, %v999, %v1003
  %v1008 = vand.u32 2147483647, %v559
  %vm1009 = vcmp.eq.f32.partialorder %v1008, 8.507059e+37
  %v1010 = vand.u32 %v559, 2147483648
  %v1011 = vor.u32 1.1754944e-38, %v1010
  %v1012 = vsel %vm1009, %v1011, %v1007
  %v1013 = vmul.f32 1.0, %v1012
  %v1014 = vrcp.pop %v560
  %v1015 = vmul.f32 %v560, %v1014
  %v1016 = vsub.f32 1.0, %v1015
  %v1017 = vmul.f32 %v1014, %v1016
  %v1018 = vadd.f32 %v1014, %v1017
  %vm1019 = vweird.f32 %v560
  %vm1020 = vweird.f32 %v1014
  %vm1021 = vmor %vm1019, %vm1020
  %v1022 = vsel %vm1021, %v1014, %v1018
  %v1023 = vand.u32 2147483647, %v560
  %vm1024 = vcmp.eq.f32.partialorder %v1023, 8.507059e+37
  %v1025 = vand.u32 %v560, 2147483648
  %v1026 = vor.u32 1.1754944e-38, %v1025
  %v1027 = vsel %vm1024, %v1026, %v1022
  %v1028 = vmul.f32 1.0, %v1027
  %v1029 = vrcp.pop %v561
  %v1030 = vmul.f32 %v561, %v1029
  %v1031 = vsub.f32 1.0, %v1030
  %v1032 = vmul.f32 %v1029, %v1031
  %v1033 = vadd.f32 %v1029, %v1032
  %vm1034 = vweird.f32 %v561
  %vm1035 = vweird.f32 %v1029
  %vm1036 = vmor %vm1034, %vm1035
  %v1037 = vsel %vm1036, %v1029, %v1033
  %v1038 = vand.u32 2147483647, %v561
  %vm1039 = vcmp.eq.f32.partialorder %v1038, 8.507059e+37
  %v1040 = vand.u32 %v561, 2147483648
  %v1041 = vor.u32 1.1754944e-38, %v1040
  %v1042 = vsel %vm1039, %v1041, %v1037
  %v1043 = vmul.f32 1.0, %v1042
  %v1044 = vrcp.pop %v562
  %v1045 = vmul.f32 %v562, %v1044
  %v1046 = vsub.f32 1.0, %v1045
  %v1047 = vmul.f32 %v1044, %v1046
  %v1048 = vadd.f32 %v1044, %v1047
  %vm1049 = vweird.f32 %v562
  %vm1050 = vweird.f32 %v1044
  %vm1051 = vmor %vm1049, %vm1050
  %v1052 = vsel %vm1051, %v1044, %v1048
  %v1053 = vand.u32 2147483647, %v562
  %vm1054 = vcmp.eq.f32.partialorder %v1053, 8.507059e+37
  %v1055 = vand.u32 %v562, 2147483648
  %v1056 = vor.u32 1.1754944e-38, %v1055
  %v1057 = vsel %vm1054, %v1056, %v1052
  %v1058 = vmul.f32 1.0, %v1057
  %v1059 = vrcp.pop %v563
  %v1060 = vmul.f32 %v563, %v1059
  %v1061 = vsub.f32 1.0, %v1060
  %v1062 = vmul.f32 %v1059, %v1061
  %v1063 = vadd.f32 %v1059, %v1062
  %vm1064 = vweird.f32 %v563
  %vm1065 = vweird.f32 %v1059
  %vm1066 = vmor %vm1064, %vm1065
  %v1067 = vsel %vm1066, %v1059, %v1063
  %v1068 = vand.u32 2147483647, %v563
  %vm1069 = vcmp.eq.f32.partialorder %v1068, 8.507059e+37
  %v1070 = vand.u32 %v563, 2147483648
  %v1071 = vor.u32 1.1754944e-38, %v1070
  %v1072 = vsel %vm1069, %v1071, %v1067
  %v1073 = vmul.f32 1.0, %v1072
  %v1074 = vrcp.pop %v564
  %v1075 = vmul.f32 %v564, %v1074
  %v1076 = vsub.f32 1.0, %v1075
  %v1077 = vmul.f32 %v1074, %v1076
  %v1078 = vadd.f32 %v1074, %v1077
  %vm1079 = vweird.f32 %v564
  %vm1080 = vweird.f32 %v1074
  %vm1081 = vmor %vm1079, %vm1080
  %v1082 = vsel %vm1081, %v1074, %v1078
  %v1083 = vand.u32 2147483647, %v564
  %vm1084 = vcmp.eq.f32.partialorder %v1083, 8.507059e+37
  %v1085 = vand.u32 %v564, 2147483648
  %v1086 = vor.u32 1.1754944e-38, %v1085
  %v1087 = vsel %vm1084, %v1086, %v1082
  %v1088 = vmul.f32 1.0, %v1087
  %v1089 = vrcp.pop %v565
  %v1090 = vmul.f32 %v565, %v1089
  %v1091 = vsub.f32 1.0, %v1090
  %v1092 = vmul.f32 %v1089, %v1091
  %v1093 = vadd.f32 %v1089, %v1092
  %vm1094 = vweird.f32 %v565
  %vm1095 = vweird.f32 %v1089
  %vm1096 = vmor %vm1094, %vm1095
  %v1097 = vsel %vm1096, %v1089, %v1093
  %v1098 = vand.u32 2147483647, %v565
  %vm1099 = vcmp.eq.f32.partialorder %v1098, 8.507059e+37
  %v1100 = vand.u32 %v565, 2147483648
  %v1101 = vor.u32 1.1754944e-38, %v1100
  %v1102 = vsel %vm1099, %v1101, %v1097
  %v1103 = vmul.f32 1.0, %v1102
  %v1104 = vrcp.pop %v566
  %v1105 = vmul.f32 %v566, %v1104
  %v1106 = vsub.f32 1.0, %v1105
  %v1107 = vmul.f32 %v1104, %v1106
  %v1108 = vadd.f32 %v1104, %v1107
  %vm1109 = vweird.f32 %v566
  %vm1110 = vweird.f32 %v1104
  %vm1111 = vmor %vm1109, %vm1110
  %v1112 = vsel %vm1111, %v1104, %v1108
  %v1113 = vand.u32 2147483647, %v566
  %vm1114 = vcmp.eq.f32.partialorder %v1113, 8.507059e+37
  %v1115 = vand.u32 %v566, 2147483648
  %v1116 = vor.u32 1.1754944e-38, %v1115
  %v1117 = vsel %vm1114, %v1116, %v1112
  %v1118 = vmul.f32 1.0, %v1117
  %v1119 = vrcp.pop %v567
  %v1120 = vmul.f32 %v567, %v1119
  %v1121 = vsub.f32 1.0, %v1120
  %v1122 = vmul.f32 %v1119, %v1121
  %v1123 = vadd.f32 %v1119, %v1122
  %vm1124 = vweird.f32 %v567
  %vm1125 = vweird.f32 %v1119
  %vm1126 = vmor %vm1124, %vm1125
  %v1127 = vsel %vm1126, %v1119, %v1123
  %v1128 = vand.u32 2147483647, %v567
  %vm1129 = vcmp.eq.f32.partialorder %v1128, 8.507059e+37
  %v1130 = vand.u32 %v567, 2147483648
  %v1131 = vor.u32 1.1754944e-38, %v1130
  %v1132 = vsel %vm1129, %v1131, %v1127
  %v1133 = vmul.f32 1.0, %v1132
  %v1134 = vrcp.pop %v568
  %v1135 = vmul.f32 %v568, %v1134
  %v1136 = vsub.f32 1.0, %v1135
  %v1137 = vmul.f32 %v1134, %v1136
  %v1138 = vadd.f32 %v1134, %v1137
  %vm1139 = vweird.f32 %v568
  %vm1140 = vweird.f32 %v1134
  %vm1141 = vmor %vm1139, %vm1140
  %v1142 = vsel %vm1141, %v1134, %v1138
  %v1143 = vand.u32 2147483647, %v568
  %vm1144 = vcmp.eq.f32.partialorder %v1143, 8.507059e+37
  %v1145 = vand.u32 %v568, 2147483648
  %v1146 = vor.u32 1.1754944e-38, %v1145
  %v1147 = vsel %vm1144, %v1146, %v1142
  %v1148 = vmul.f32 1.0, %v1147
  %v1149 = vrcp.pop %v569
  %v1150 = vmul.f32 %v569, %v1149
  %v1151 = vsub.f32 1.0, %v1150
  %v1152 = vmul.f32 %v1149, %v1151
  %v1153 = vadd.f32 %v1149, %v1152
  %vm1154 = vweird.f32 %v569
  %vm1155 = vweird.f32 %v1149
  %vm1156 = vmor %vm1154, %vm1155
  %v1157 = vsel %vm1156, %v1149, %v1153
  %v1158 = vand.u32 2147483647, %v569
  %vm1159 = vcmp.eq.f32.partialorder %v1158, 8.507059e+37
  %v1160 = vand.u32 %v569, 2147483648
  %v1161 = vor.u32 1.1754944e-38, %v1160
  %v1162 = vsel %vm1159, %v1161, %v1157
  %v1163 = vmul.f32 1.0, %v1162
  %v1164 = vrcp.pop %v570
  %v1165 = vmul.f32 %v570, %v1164
  %v1166 = vsub.f32 1.0, %v1165
  %v1167 = vmul.f32 %v1164, %v1166
  %v1168 = vadd.f32 %v1164, %v1167
  %vm1169 = vweird.f32 %v570
  %vm1170 = vweird.f32 %v1164
  %vm1171 = vmor %vm1169, %vm1170
  %v1172 = vsel %vm1171, %v1164, %v1168
  %v1173 = vand.u32 2147483647, %v570
  %vm1174 = vcmp.eq.f32.partialorder %v1173, 8.507059e+37
  %v1175 = vand.u32 %v570, 2147483648
  %v1176 = vor.u32 1.1754944e-38, %v1175
  %v1177 = vsel %vm1174, %v1176, %v1172
  %v1178 = vmul.f32 1.0, %v1177
  %v1179 = vrcp.pop %v571
  %v1180 = vmul.f32 %v571, %v1179
  %v1181 = vsub.f32 1.0, %v1180
  %v1182 = vmul.f32 %v1179, %v1181
  %v1183 = vadd.f32 %v1179, %v1182
  %vm1184 = vweird.f32 %v571
  %vm1185 = vweird.f32 %v1179
  %vm1186 = vmor %vm1184, %vm1185
  %v1187 = vsel %vm1186, %v1179, %v1183
  %v1188 = vand.u32 2147483647, %v571
  %vm1189 = vcmp.eq.f32.partialorder %v1188, 8.507059e+37
  %v1190 = vand.u32 %v571, 2147483648
  %v1191 = vor.u32 1.1754944e-38, %v1190
  %v1192 = vsel %vm1189, %v1191, %v1187
  %v1193 = vmul.f32 1.0, %v1192
  %v1194 = vrcp.pop %v572
  %v1195 = vmul.f32 %v572, %v1194
  %v1196 = vsub.f32 1.0, %v1195
  %v1197 = vmul.f32 %v1194, %v1196
  %v1198 = vadd.f32 %v1194, %v1197
  %vm1199 = vweird.f32 %v572
  %vm1200 = vweird.f32 %v1194
  %vm1201 = vmor %vm1199, %vm1200
  %v1202 = vsel %vm1201, %v1194, %v1198
  %v1203 = vand.u32 2147483647, %v572
  %vm1204 = vcmp.eq.f32.partialorder %v1203, 8.507059e+37
  %v1205 = vand.u32 %v572, 2147483648
  %v1206 = vor.u32 1.1754944e-38, %v1205
  %v1207 = vsel %vm1204, %v1206, %v1202
  %v1208 = vmul.f32 1.0, %v1207
  %v1209 = vrcp.pop %v573
  %v1210 = vmul.f32 %v573, %v1209
  %v1211 = vsub.f32 1.0, %v1210
  %v1212 = vmul.f32 %v1209, %v1211
  %v1213 = vadd.f32 %v1209, %v1212
  %vm1214 = vweird.f32 %v573
  %vm1215 = vweird.f32 %v1209
  %vm1216 = vmor %vm1214, %vm1215
  %v1217 = vsel %vm1216, %v1209, %v1213
  %v1218 = vand.u32 2147483647, %v573
  %vm1219 = vcmp.eq.f32.partialorder %v1218, 8.507059e+37
  %v1220 = vand.u32 %v573, 2147483648
  %v1221 = vor.u32 1.1754944e-38, %v1220
  %v1222 = vsel %vm1219, %v1221, %v1217
  %v1223 = vmul.f32 1.0, %v1222
  %v1224 = vrcp.pop %v574
  %v1225 = vmul.f32 %v574, %v1224
  %v1226 = vsub.f32 1.0, %v1225
  %v1227 = vmul.f32 %v1224, %v1226
  %v1228 = vadd.f32 %v1224, %v1227
  %vm1229 = vweird.f32 %v574
  %vm1230 = vweird.f32 %v1224
  %vm1231 = vmor %vm1229, %vm1230
  %v1232 = vsel %vm1231, %v1224, %v1228
  %v1233 = vand.u32 2147483647, %v574
  %vm1234 = vcmp.eq.f32.partialorder %v1233, 8.507059e+37
  %v1235 = vand.u32 %v574, 2147483648
  %v1236 = vor.u32 1.1754944e-38, %v1235
  %v1237 = vsel %vm1234, %v1236, %v1232
  %v1238 = vmul.f32 1.0, %v1237
  %v1239 = vrcp.pop %v575
  %v1240 = vmul.f32 %v575, %v1239
  %v1241 = vsub.f32 1.0, %v1240
  %v1242 = vmul.f32 %v1239, %v1241
  %v1243 = vadd.f32 %v1239, %v1242
  %vm1244 = vweird.f32 %v575
  %vm1245 = vweird.f32 %v1239
  %vm1246 = vmor %vm1244, %vm1245
  %v1247 = vsel %vm1246, %v1239, %v1243
  %v1248 = vand.u32 2147483647, %v575
  %vm1249 = vcmp.eq.f32.partialorder %v1248, 8.507059e+37
  %v1250 = vand.u32 %v575, 2147483648
  %v1251 = vor.u32 1.1754944e-38, %v1250
  %v1252 = vsel %vm1249, %v1251, %v1247
  %v1253 = vmul.f32 1.0, %v1252
  %v1254 = vrcp.pop %v576
  %v1255 = vmul.f32 %v576, %v1254
  %v1256 = vsub.f32 1.0, %v1255
  %v1257 = vmul.f32 %v1254, %v1256
  %v1258 = vadd.f32 %v1254, %v1257
  %vm1259 = vweird.f32 %v576
  %vm1260 = vweird.f32 %v1254
  %vm1261 = vmor %vm1259, %vm1260
  %v1262 = vsel %vm1261, %v1254, %v1258
  %v1263 = vand.u32 2147483647, %v576
  %vm1264 = vcmp.eq.f32.partialorder %v1263, 8.507059e+37
  %v1265 = vand.u32 %v576, 2147483648
  %v1266 = vor.u32 1.1754944e-38, %v1265
  %v1267 = vsel %vm1264, %v1266, %v1262
  %v1268 = vmul.f32 1.0, %v1267
  %v1269 = vrcp.pop %v577
  %v1270 = vmul.f32 %v577, %v1269
  %v1271 = vsub.f32 1.0, %v1270
  %v1272 = vmul.f32 %v1269, %v1271
  %v1273 = vadd.f32 %v1269, %v1272
  %vm1274 = vweird.f32 %v577
  %vm1275 = vweird.f32 %v1269
  %vm1276 = vmor %vm1274, %vm1275
  %v1277 = vsel %vm1276, %v1269, %v1273
  %v1278 = vand.u32 2147483647, %v577
  %vm1279 = vcmp.eq.f32.partialorder %v1278, 8.507059e+37
  %v1280 = vand.u32 %v577, 2147483648
  %v1281 = vor.u32 1.1754944e-38, %v1280
  %v1282 = vsel %vm1279, %v1281, %v1277
  %v1283 = vmul.f32 1.0, %v1282
  %v1284 = vrcp.pop %v578
  %v1285 = vmul.f32 %v578, %v1284
  %v1286 = vsub.f32 1.0, %v1285
  %v1287 = vmul.f32 %v1284, %v1286
  %v1288 = vadd.f32 %v1284, %v1287
  %vm1289 = vweird.f32 %v578
  %vm1290 = vweird.f32 %v1284
  %vm1291 = vmor %vm1289, %vm1290
  %v1292 = vsel %vm1291, %v1284, %v1288
  %v1293 = vand.u32 2147483647, %v578
  %vm1294 = vcmp.eq.f32.partialorder %v1293, 8.507059e+37
  %v1295 = vand.u32 %v578, 2147483648
  %v1296 = vor.u32 1.1754944e-38, %v1295
  %v1297 = vsel %vm1294, %v1296, %v1292
  %v1298 = vmul.f32 1.0, %v1297
  %v1299 = vmul.f32 %v210, %v593
  %v1300 = vmul.f32 %v275, %v608
  %v1301 = vmul.f32 %v340, %v623
  %v1302 = vmul.f32 %v213, %v638
  %v1303 = vmul.f32 %v278, %v653
  %v1304 = vmul.f32 %v343, %v668
  %v1305 = vmul.f32 %v216, %v683
  %v1306 = vmul.f32 %v281, %v698
  %v1307 = vmul.f32 %v346, %v713
  %v1308 = vmul.f32 %v219, %v728
  %v1309 = vmul.f32 %v284, %v743
  %v1310 = vmul.f32 %v349, %v758
  %v1311 = vmul.f32 %v222, %v773
  %v1312 = vmul.f32 %v287, %v788
  %v1313 = vmul.f32 %v352, %v803
  %v1314 = vmul.f32 %v225, %v818
  %v1315 = vmul.f32 %v290, %v833
  %v1316 = vmul.f32 %v355, %v848
  %v1317 = vmul.f32 %v228, %v863
  %v1318 = vmul.f32 %v293, %v878
  %v1319 = vmul.f32 %v358, %v893
  %v1320 = vmul.f32 %v231, %v908
  %v1321 = vmul.f32 %v296, %v923
  %v1322 = vmul.f32 %v361, %v938
  %v1323 = vmul.f32 %v234, %v953
  %v1324 = vmul.f32 %v299, %v968
  %v1325 = vmul.f32 %v364, %v983
  %v1326 = vmul.f32 %v237, %v998
  %v1327 = vmul.f32 %v302, %v1013
  %v1328 = vmul.f32 %v367, %v1028
  %v1329 = vmul.f32 %v240, %v1043
  %v1330 = vmul.f32 %v305, %v1058
  %v1331 = vmul.f32 %v370, %v1073
  %v1332 = vmul.f32 %v243, %v1088
  %v1333 = vmul.f32 %v308, %v1103
  %v1334 = vmul.f32 %v373, %v1118
  %v1335 = vmul.f32 %v246, %v1133
  %v1336 = vmul.f32 %v311, %v1148
  %v1337 = vmul.f32 %v376, %v1163
  %v1338 = vmul.f32 %v249, %v1178
  %v1339 = vmul.f32 %v314, %v1193
  %v1340 = vmul.f32 %v379, %v1208
  %v1341 = vmul.f32 %v252, %v1223
  %v1342 = vmul.f32 %v317, %v1238
  %v1343 = vmul.f32 %v382, %v1253
  %v1344 = vmul.f32 %v255, %v1268
  %v1345 = vmul.f32 %v320, %v1283
  %v1346 = vmul.f32 %v385, %v1298
  %v1347 = vld [vmem:[%s3] sm:$0xff]
  %v1348 = vld [vmem:[%s3 + $0x8] sm:$0xff]
  %v1349 = vld [vmem:[%s3 + $0x10] sm:$0xff]
  %v1350 = vld [vmem:[%s3 + $0x18] sm:$0xff]
  %v1351 = vld [vmem:[%s3 + $0x20] sm:$0xff]
  %v1352 = vld [vmem:[%s3 + $0x28] sm:$0xff]
  %v1353 = vld [vmem:[%s3 + $0x30] sm:$0xff]
  %v1354 = vld [vmem:[%s3 + $0x38] sm:$0xff]
  %v1355 = vld [vmem:[%s4] sm:$0xff]
  %v1356 = vld [vmem:[%s4 + $0x8] sm:$0xff]
  %v1357 = vld [vmem:[%s4 + $0x10] sm:$0xff]
  %v1358 = vld [vmem:[%s4 + $0x18] sm:$0xff]
  %v1359 = vld [vmem:[%s4 + $0x20] sm:$0xff]
  %v1360 = vld [vmem:[%s4 + $0x28] sm:$0xff]
  %v1361 = vld [vmem:[%s4 + $0x30] sm:$0xff]
  %v1362 = vld [vmem:[%s4 + $0x38] sm:$0xff]
  %1364 = vset.pattern.permute.xlu0 0
  %1365 = vperm.xlu0 %1364, %v1355
  %v1366 = vpop.permute.xlu0 %1365
  %1369 = vset.pattern.permute.xlu0 0
  %1370 = vperm.xlu0 %1369, %v1356
  %v1371 = vpop.permute.xlu0 %1370
  %1374 = vset.pattern.permute.xlu0 0
  %1375 = vperm.xlu0 %1374, %v1357
  %v1376 = vpop.permute.xlu0 %1375
  %1379 = vset.pattern.permute.xlu0 0
  %1380 = vperm.xlu0 %1379, %v1358
  %v1381 = vpop.permute.xlu0 %1380
  %1384 = vset.pattern.permute.xlu0 0
  %1385 = vperm.xlu0 %1384, %v1359
  %v1386 = vpop.permute.xlu0 %1385
  %1389 = vset.pattern.permute.xlu0 0
  %1390 = vperm.xlu0 %1389, %v1360
  %v1391 = vpop.permute.xlu0 %1390
  %1394 = vset.pattern.permute.xlu0 0
  %1395 = vperm.xlu0 %1394, %v1361
  %v1396 = vpop.permute.xlu0 %1395
  %1399 = vset.pattern.permute.xlu0 0
  %1400 = vperm.xlu0 %1399, %v1362
  %v1401 = vpop.permute.xlu0 %1400
  %1403 = vmatpush.msra.mxu0 %v1344
  %1404 = vmatpush.msra.mxu0 %v1341
  %1405 = vmatpush.msra.mxu0 %v1338
  %1406 = vmatpush.msra.mxu0 %v1335
  %1407 = vmatpush.msra.mxu0 %v1332
  %1408 = vmatpush.msra.mxu0 %v1329
  %1409 = vmatpush.msra.mxu0 %v1326
  %1410 = vmatpush.msra.mxu0 %v1323
  %1411 = vmatpush.msra.mxu0 %v1320
  %1412 = vmatpush.msra.mxu0 %v1317
  %1413 = vmatpush.msra.mxu0 %v1314
  %1414 = vmatpush.msra.mxu0 %v1311
  %1415 = vmatpush.msra.mxu0 %v1308
  %1416 = vmatpush.msra.mxu0 %v1305
  %1417 = vmatpush.msra.mxu0 %v1302
  %1418 = vmatpush.msra.mxu0 %v1299
  %1419 = vmatmul.f32.gmra.mxu0 %v1347
  %v1420 = vpop.f32.mrf.mxu0
  %v1421 = vadd.f32 %v1366, %v1420
  %1422 = vmatmul.f32.gmra.mxu0 %v1348
  %v1423 = vpop.f32.mrf.mxu0
  %v1424 = vadd.f32 %v1371, %v1423
  %1425 = vmatmul.f32.gmra.mxu0 %v1349
  %v1426 = vpop.f32.mrf.mxu0
  %v1427 = vadd.f32 %v1376, %v1426
  %1428 = vmatmul.f32.gmra.mxu0 %v1350
  %v1429 = vpop.f32.mrf.mxu0
  %v1430 = vadd.f32 %v1381, %v1429
  %1431 = vmatmul.f32.gmra.mxu0 %v1351
  %v1432 = vpop.f32.mrf.mxu0
  %v1433 = vadd.f32 %v1386, %v1432
  %1434 = vmatmul.f32.gmra.mxu0 %v1352
  %v1435 = vpop.f32.mrf.mxu0
  %v1436 = vadd.f32 %v1391, %v1435
  %1437 = vmatmul.f32.gmra.mxu0 %v1353
  %v1438 = vpop.f32.mrf.mxu0
  %v1439 = vadd.f32 %v1396, %v1438
  %1440 = vmatmul.f32.gmra.mxu0 %v1354
  %v1441 = vpop.f32.mrf.mxu0
  %v1442 = vadd.f32 %v1401, %v1441
  %1443 = vdwg.mxu0
  %1444 = vmatpush.msra.mxu0 %v1345
  %1445 = vmatpush.msra.mxu0 %v1342
  %1446 = vmatpush.msra.mxu0 %v1339
  %1447 = vmatpush.msra.mxu0 %v1336
  %1448 = vmatpush.msra.mxu0 %v1333
  %1449 = vmatpush.msra.mxu0 %v1330
  %1450 = vmatpush.msra.mxu0 %v1327
  %1451 = vmatpush.msra.mxu0 %v1324
  %1452 = vmatpush.msra.mxu0 %v1321
  %1453 = vmatpush.msra.mxu0 %v1318
  %1454 = vmatpush.msra.mxu0 %v1315
  %1455 = vmatpush.msra.mxu0 %v1312
  %1456 = vmatpush.msra.mxu0 %v1309
  %1457 = vmatpush.msra.mxu0 %v1306
  %1458 = vmatpush.msra.mxu0 %v1303
  %1459 = vmatpush.msra.mxu0 %v1300
  %1460 = vmatmul.f32.gmra.mxu0 %v1347
  %v1461 = vpop.f32.mrf.mxu0
  %v1462 = vadd.f32 %v1366, %v1461
  %1463 = vmatmul.f32.gmra.mxu0 %v1348
  %v1464 = vpop.f32.mrf.mxu0
  %v1465 = vadd.f32 %v1371, %v1464
  %1466 = vmatmul.f32.gmra.mxu0 %v1349
  %v1467 = vpop.f32.mrf.mxu0
  %v1468 = vadd.f32 %v1376, %v1467
  %1469 = vmatmul.f32.gmra.mxu0 %v1350
  %v1470 = vpop.f32.mrf.mxu0
  %v1471 = vadd.f32 %v1381, %v1470
  %1472 = vmatmul.f32.gmra.mxu0 %v1351
  %v1473 = vpop.f32.mrf.mxu0
  %v1474 = vadd.f32 %v1386, %v1473
  %1475 = vmatmul.f32.gmra.mxu0 %v1352
  %v1476 = vpop.f32.mrf.mxu0
  %v1477 = vadd.f32 %v1391, %v1476
  %1478 = vmatmul.f32.gmra.mxu0 %v1353
  %v1479 = vpop.f32.mrf.mxu0
  %v1480 = vadd.f32 %v1396, %v1479
  %1481 = vmatmul.f32.gmra.mxu0 %v1354
  %v1482 = vpop.f32.mrf.mxu0
  %v1483 = vadd.f32 %v1401, %v1482
  %1484 = vdwg.mxu0
  %1485 = vmatpush.msra.mxu0 %v1346
  %1486 = vmatpush.msra.mxu0 %v1343
  %1487 = vmatpush.msra.mxu0 %v1340
  %1488 = vmatpush.msra.mxu0 %v1337
  %1489 = vmatpush.msra.mxu0 %v1334
  %1490 = vmatpush.msra.mxu0 %v1331
  %1491 = vmatpush.msra.mxu0 %v1328
  %1492 = vmatpush.msra.mxu0 %v1325
  %1493 = vmatpush.msra.mxu0 %v1322
  %1494 = vmatpush.msra.mxu0 %v1319
  %1495 = vmatpush.msra.mxu0 %v1316
  %1496 = vmatpush.msra.mxu0 %v1313
  %1497 = vmatpush.msra.mxu0 %v1310
  %1498 = vmatpush.msra.mxu0 %v1307
  %1499 = vmatpush.msra.mxu0 %v1304
  %1500 = vmatpush.msra.mxu0 %v1301
  %1501 = vmatmul.f32.gmra.mxu0 %v1347
  %v1502 = vpop.f32.mrf.mxu0
  %v1503 = vadd.f32 %v1366, %v1502
  %1504 = vmatmul.f32.gmra.mxu0 %v1348
  %v1505 = vpop.f32.mrf.mxu0
  %v1506 = vadd.f32 %v1371, %v1505
  %1507 = vmatmul.f32.gmra.mxu0 %v1349
  %v1508 = vpop.f32.mrf.mxu0
  %v1509 = vadd.f32 %v1376, %v1508
  %1510 = vmatmul.f32.gmra.mxu0 %v1350
  %v1511 = vpop.f32.mrf.mxu0
  %v1512 = vadd.f32 %v1381, %v1511
  %1513 = vmatmul.f32.gmra.mxu0 %v1351
  %v1514 = vpop.f32.mrf.mxu0
  %v1515 = vadd.f32 %v1386, %v1514
  %1516 = vmatmul.f32.gmra.mxu0 %v1352
  %v1517 = vpop.f32.mrf.mxu0
  %v1518 = vadd.f32 %v1391, %v1517
  %1519 = vmatmul.f32.gmra.mxu0 %v1353
  %v1520 = vpop.f32.mrf.mxu0
  %v1521 = vadd.f32 %v1396, %v1520
  %1522 = vmatmul.f32.gmra.mxu0 %v1354
  %v1523 = vpop.f32.mrf.mxu0
  %v1524 = vadd.f32 %v1401, %v1523
  %1525 = vdwg.mxu0
  %v1526 = vxor.u32 %v1421, 2147483648
  %v1527 = vxor.u32 %v1462, 2147483648
  %v1528 = vxor.u32 %v1503, 2147483648
  %v1529 = vxor.u32 %v1424, 2147483648
  %v1530 = vxor.u32 %v1465, 2147483648
  %v1531 = vxor.u32 %v1506, 2147483648
  %v1532 = vxor.u32 %v1427, 2147483648
  %v1533 = vxor.u32 %v1468, 2147483648
  %v1534 = vxor.u32 %v1509, 2147483648
  %v1535 = vxor.u32 %v1430, 2147483648
  %v1536 = vxor.u32 %v1471, 2147483648
  %v1537 = vxor.u32 %v1512, 2147483648
  %v1538 = vxor.u32 %v1433, 2147483648
  %v1539 = vxor.u32 %v1474, 2147483648
  %v1540 = vxor.u32 %v1515, 2147483648
  %v1541 = vxor.u32 %v1436, 2147483648
  %v1542 = vxor.u32 %v1477, 2147483648
  %v1543 = vxor.u32 %v1518, 2147483648
  %v1544 = vxor.u32 %v1439, 2147483648
  %v1545 = vxor.u32 %v1480, 2147483648
  %v1546 = vxor.u32 %v1521, 2147483648
  %v1547 = vxor.u32 %v1442, 2147483648
  %v1548 = vxor.u32 %v1483, 2147483648
  %v1549 = vxor.u32 %v1524, 2147483648
  %v1550 = vmul.f32 %v1526, 1.442695
  %v1551 = vpow.pop %v1550
  %v1552 = vmul.f32 %v1527, 1.442695
  %v1553 = vpow.pop %v1552
  %v1554 = vmul.f32 %v1528, 1.442695
  %v1555 = vpow.pop %v1554
  %v1556 = vmul.f32 %v1529, 1.442695
  %v1557 = vpow.pop %v1556
  %v1558 = vmul.f32 %v1530, 1.442695
  %v1559 = vpow.pop %v1558
  %v1560 = vmul.f32 %v1531, 1.442695
  %v1561 = vpow.pop %v1560
  %v1562 = vmul.f32 %v1532, 1.442695
  %v1563 = vpow.pop %v1562
  %v1564 = vmul.f32 %v1533, 1.442695
  %v1565 = vpow.pop %v1564
  %v1566 = vmul.f32 %v1534, 1.442695
  %v1567 = vpow.pop %v1566
  %v1568 = vmul.f32 %v1535, 1.442695
  %v1569 = vpow.pop %v1568
  %v1570 = vmul.f32 %v1536, 1.442695
  %v1571 = vpow.pop %v1570
  %v1572 = vmul.f32 %v1537, 1.442695
  %v1573 = vpow.pop %v1572
  %v1574 = vmul.f32 %v1538, 1.442695
  %v1575 = vpow.pop %v1574
  %v1576 = vmul.f32 %v1539, 1.442695
  %v1577 = vpow.pop %v1576
  %v1578 = vmul.f32 %v1540, 1.442695
  %v1579 = vpow.pop %v1578
  %v1580 = vmul.f32 %v1541, 1.442695
  %v1581 = vpow.pop %v1580
  %v1582 = vmul.f32 %v1542, 1.442695
  %v1583 = vpow.pop %v1582
  %v1584 = vmul.f32 %v1543, 1.442695
  %v1585 = vpow.pop %v1584
  %v1586 = vmul.f32 %v1544, 1.442695
  %v1587 = vpow.pop %v1586
  %v1588 = vmul.f32 %v1545, 1.442695
  %v1589 = vpow.pop %v1588
  %v1590 = vmul.f32 %v1546, 1.442695
  %v1591 = vpow.pop %v1590
  %v1592 = vmul.f32 %v1547, 1.442695
  %v1593 = vpow.pop %v1592
  %v1594 = vmul.f32 %v1548, 1.442695
  %v1595 = vpow.pop %v1594
  %v1596 = vmul.f32 %v1549, 1.442695
  %v1597 = vpow.pop %v1596
  %v1598 = vadd.f32 %v1551, 1.0
  %v1599 = vadd.f32 %v1553, 1.0
  %v1600 = vadd.f32 %v1555, 1.0
  %v1601 = vadd.f32 %v1557, 1.0
  %v1602 = vadd.f32 %v1559, 1.0
  %v1603 = vadd.f32 %v1561, 1.0
  %v1604 = vadd.f32 %v1563, 1.0
  %v1605 = vadd.f32 %v1565, 1.0
  %v1606 = vadd.f32 %v1567, 1.0
  %v1607 = vadd.f32 %v1569, 1.0
  %v1608 = vadd.f32 %v1571, 1.0
  %v1609 = vadd.f32 %v1573, 1.0
  %v1610 = vadd.f32 %v1575, 1.0
  %v1611 = vadd.f32 %v1577, 1.0
  %v1612 = vadd.f32 %v1579, 1.0
  %v1613 = vadd.f32 %v1581, 1.0
  %v1614 = vadd.f32 %v1583, 1.0
  %v1615 = vadd.f32 %v1585, 1.0
  %v1616 = vadd.f32 %v1587, 1.0
  %v1617 = vadd.f32 %v1589, 1.0
  %v1618 = vadd.f32 %v1591, 1.0
  %v1619 = vadd.f32 %v1593, 1.0
  %v1620 = vadd.f32 %v1595, 1.0
  %v1621 = vadd.f32 %v1597, 1.0
  %v1622 = vrcp.pop %v1598
  %v1623 = vmul.f32 %v1598, %v1622
  %v1624 = vsub.f32 1.0, %v1623
  %v1625 = vmul.f32 %v1622, %v1624
  %v1626 = vadd.f32 %v1622, %v1625
  %vm1627 = vweird.f32 %v1598
  %vm1628 = vweird.f32 %v1622
  %vm1629 = vmor %vm1627, %vm1628
  %v1630 = vsel %vm1629, %v1622, %v1626
  %v1631 = vand.u32 2147483647, %v1598
  %vm1632 = vcmp.eq.f32.partialorder %v1631, 8.507059e+37
  %v1633 = vand.u32 %v1598, 2147483648
  %v1634 = vor.u32 1.1754944e-38, %v1633
  %v1635 = vsel %vm1632, %v1634, %v1630
  %v1636 = vmul.f32 1.0, %v1635
  %v1637 = vrcp.pop %v1599
  %v1638 = vmul.f32 %v1599, %v1637
  %v1639 = vsub.f32 1.0, %v1638
  %v1640 = vmul.f32 %v1637, %v1639
  %v1641 = vadd.f32 %v1637, %v1640
  %vm1642 = vweird.f32 %v1599
  %vm1643 = vweird.f32 %v1637
  %vm1644 = vmor %vm1642, %vm1643
  %v1645 = vsel %vm1644, %v1637, %v1641
  %v1646 = vand.u32 2147483647, %v1599
  %vm1647 = vcmp.eq.f32.partialorder %v1646, 8.507059e+37
  %v1648 = vand.u32 %v1599, 2147483648
  %v1649 = vor.u32 1.1754944e-38, %v1648
  %v1650 = vsel %vm1647, %v1649, %v1645
  %v1651 = vmul.f32 1.0, %v1650
  %v1652 = vrcp.pop %v1600
  %v1653 = vmul.f32 %v1600, %v1652
  %v1654 = vsub.f32 1.0, %v1653
  %v1655 = vmul.f32 %v1652, %v1654
  %v1656 = vadd.f32 %v1652, %v1655
  %vm1657 = vweird.f32 %v1600
  %vm1658 = vweird.f32 %v1652
  %vm1659 = vmor %vm1657, %vm1658
  %v1660 = vsel %vm1659, %v1652, %v1656
  %v1661 = vand.u32 2147483647, %v1600
  %vm1662 = vcmp.eq.f32.partialorder %v1661, 8.507059e+37
  %v1663 = vand.u32 %v1600, 2147483648
  %v1664 = vor.u32 1.1754944e-38, %v1663
  %v1665 = vsel %vm1662, %v1664, %v1660
  %v1666 = vmul.f32 1.0, %v1665
  %v1667 = vrcp.pop %v1601
  %v1668 = vmul.f32 %v1601, %v1667
  %v1669 = vsub.f32 1.0, %v1668
  %v1670 = vmul.f32 %v1667, %v1669
  %v1671 = vadd.f32 %v1667, %v1670
  %vm1672 = vweird.f32 %v1601
  %vm1673 = vweird.f32 %v1667
  %vm1674 = vmor %vm1672, %vm1673
  %v1675 = vsel %vm1674, %v1667, %v1671
  %v1676 = vand.u32 2147483647, %v1601
  %vm1677 = vcmp.eq.f32.partialorder %v1676, 8.507059e+37
  %v1678 = vand.u32 %v1601, 2147483648
  %v1679 = vor.u32 1.1754944e-38, %v1678
  %v1680 = vsel %vm1677, %v1679, %v1675
  %v1681 = vmul.f32 1.0, %v1680
  %v1682 = vrcp.pop %v1602
  %v1683 = vmul.f32 %v1602, %v1682
  %v1684 = vsub.f32 1.0, %v1683
  %v1685 = vmul.f32 %v1682, %v1684
  %v1686 = vadd.f32 %v1682, %v1685
  %vm1687 = vweird.f32 %v1602
  %vm1688 = vweird.f32 %v1682
  %vm1689 = vmor %vm1687, %vm1688
  %v1690 = vsel %vm1689, %v1682, %v1686
  %v1691 = vand.u32 2147483647, %v1602
  %vm1692 = vcmp.eq.f32.partialorder %v1691, 8.507059e+37
  %v1693 = vand.u32 %v1602, 2147483648
  %v1694 = vor.u32 1.1754944e-38, %v1693
  %v1695 = vsel %vm1692, %v1694, %v1690
  %v1696 = vmul.f32 1.0, %v1695
  %v1697 = vrcp.pop %v1603
  %v1698 = vmul.f32 %v1603, %v1697
  %v1699 = vsub.f32 1.0, %v1698
  %v1700 = vmul.f32 %v1697, %v1699
  %v1701 = vadd.f32 %v1697, %v1700
  %vm1702 = vweird.f32 %v1603
  %vm1703 = vweird.f32 %v1697
  %vm1704 = vmor %vm1702, %vm1703
  %v1705 = vsel %vm1704, %v1697, %v1701
  %v1706 = vand.u32 2147483647, %v1603
  %vm1707 = vcmp.eq.f32.partialorder %v1706, 8.507059e+37
  %v1708 = vand.u32 %v1603, 2147483648
  %v1709 = vor.u32 1.1754944e-38, %v1708
  %v1710 = vsel %vm1707, %v1709, %v1705
  %v1711 = vmul.f32 1.0, %v1710
  %v1712 = vrcp.pop %v1604
  %v1713 = vmul.f32 %v1604, %v1712
  %v1714 = vsub.f32 1.0, %v1713
  %v1715 = vmul.f32 %v1712, %v1714
  %v1716 = vadd.f32 %v1712, %v1715
  %vm1717 = vweird.f32 %v1604
  %vm1718 = vweird.f32 %v1712
  %vm1719 = vmor %vm1717, %vm1718
  %v1720 = vsel %vm1719, %v1712, %v1716
  %v1721 = vand.u32 2147483647, %v1604
  %vm1722 = vcmp.eq.f32.partialorder %v1721, 8.507059e+37
  %v1723 = vand.u32 %v1604, 2147483648
  %v1724 = vor.u32 1.1754944e-38, %v1723
  %v1725 = vsel %vm1722, %v1724, %v1720
  %v1726 = vmul.f32 1.0, %v1725
  %v1727 = vrcp.pop %v1605
  %v1728 = vmul.f32 %v1605, %v1727
  %v1729 = vsub.f32 1.0, %v1728
  %v1730 = vmul.f32 %v1727, %v1729
  %v1731 = vadd.f32 %v1727, %v1730
  %vm1732 = vweird.f32 %v1605
  %vm1733 = vweird.f32 %v1727
  %vm1734 = vmor %vm1732, %vm1733
  %v1735 = vsel %vm1734, %v1727, %v1731
  %v1736 = vand.u32 2147483647, %v1605
  %vm1737 = vcmp.eq.f32.partialorder %v1736, 8.507059e+37
  %v1738 = vand.u32 %v1605, 2147483648
  %v1739 = vor.u32 1.1754944e-38, %v1738
  %v1740 = vsel %vm1737, %v1739, %v1735
  %v1741 = vmul.f32 1.0, %v1740
  %v1742 = vrcp.pop %v1606
  %v1743 = vmul.f32 %v1606, %v1742
  %v1744 = vsub.f32 1.0, %v1743
  %v1745 = vmul.f32 %v1742, %v1744
  %v1746 = vadd.f32 %v1742, %v1745
  %vm1747 = vweird.f32 %v1606
  %vm1748 = vweird.f32 %v1742
  %vm1749 = vmor %vm1747, %vm1748
  %v1750 = vsel %vm1749, %v1742, %v1746
  %v1751 = vand.u32 2147483647, %v1606
  %vm1752 = vcmp.eq.f32.partialorder %v1751, 8.507059e+37
  %v1753 = vand.u32 %v1606, 2147483648
  %v1754 = vor.u32 1.1754944e-38, %v1753
  %v1755 = vsel %vm1752, %v1754, %v1750
  %v1756 = vmul.f32 1.0, %v1755
  %v1757 = vrcp.pop %v1607
  %v1758 = vmul.f32 %v1607, %v1757
  %v1759 = vsub.f32 1.0, %v1758
  %v1760 = vmul.f32 %v1757, %v1759
  %v1761 = vadd.f32 %v1757, %v1760
  %vm1762 = vweird.f32 %v1607
  %vm1763 = vweird.f32 %v1757
  %vm1764 = vmor %vm1762, %vm1763
  %v1765 = vsel %vm1764, %v1757, %v1761
  %v1766 = vand.u32 2147483647, %v1607
  %vm1767 = vcmp.eq.f32.partialorder %v1766, 8.507059e+37
  %v1768 = vand.u32 %v1607, 2147483648
  %v1769 = vor.u32 1.1754944e-38, %v1768
  %v1770 = vsel %vm1767, %v1769, %v1765
  %v1771 = vmul.f32 1.0, %v1770
  %v1772 = vrcp.pop %v1608
  %v1773 = vmul.f32 %v1608, %v1772
  %v1774 = vsub.f32 1.0, %v1773
  %v1775 = vmul.f32 %v1772, %v1774
  %v1776 = vadd.f32 %v1772, %v1775
  %vm1777 = vweird.f32 %v1608
  %vm1778 = vweird.f32 %v1772
  %vm1779 = vmor %vm1777, %vm1778
  %v1780 = vsel %vm1779, %v1772, %v1776
  %v1781 = vand.u32 2147483647, %v1608
  %vm1782 = vcmp.eq.f32.partialorder %v1781, 8.507059e+37
  %v1783 = vand.u32 %v1608, 2147483648
  %v1784 = vor.u32 1.1754944e-38, %v1783
  %v1785 = vsel %vm1782, %v1784, %v1780
  %v1786 = vmul.f32 1.0, %v1785
  %v1787 = vrcp.pop %v1609
  %v1788 = vmul.f32 %v1609, %v1787
  %v1789 = vsub.f32 1.0, %v1788
  %v1790 = vmul.f32 %v1787, %v1789
  %v1791 = vadd.f32 %v1787, %v1790
  %vm1792 = vweird.f32 %v1609
  %vm1793 = vweird.f32 %v1787
  %vm1794 = vmor %vm1792, %vm1793
  %v1795 = vsel %vm1794, %v1787, %v1791
  %v1796 = vand.u32 2147483647, %v1609
  %vm1797 = vcmp.eq.f32.partialorder %v1796, 8.507059e+37
  %v1798 = vand.u32 %v1609, 2147483648
  %v1799 = vor.u32 1.1754944e-38, %v1798
  %v1800 = vsel %vm1797, %v1799, %v1795
  %v1801 = vmul.f32 1.0, %v1800
  %v1802 = vrcp.pop %v1610
  %v1803 = vmul.f32 %v1610, %v1802
  %v1804 = vsub.f32 1.0, %v1803
  %v1805 = vmul.f32 %v1802, %v1804
  %v1806 = vadd.f32 %v1802, %v1805
  %vm1807 = vweird.f32 %v1610
  %vm1808 = vweird.f32 %v1802
  %vm1809 = vmor %vm1807, %vm1808
  %v1810 = vsel %vm1809, %v1802, %v1806
  %v1811 = vand.u32 2147483647, %v1610
  %vm1812 = vcmp.eq.f32.partialorder %v1811, 8.507059e+37
  %v1813 = vand.u32 %v1610, 2147483648
  %v1814 = vor.u32 1.1754944e-38, %v1813
  %v1815 = vsel %vm1812, %v1814, %v1810
  %v1816 = vmul.f32 1.0, %v1815
  %v1817 = vrcp.pop %v1611
  %v1818 = vmul.f32 %v1611, %v1817
  %v1819 = vsub.f32 1.0, %v1818
  %v1820 = vmul.f32 %v1817, %v1819
  %v1821 = vadd.f32 %v1817, %v1820
  %vm1822 = vweird.f32 %v1611
  %vm1823 = vweird.f32 %v1817
  %vm1824 = vmor %vm1822, %vm1823
  %v1825 = vsel %vm1824, %v1817, %v1821
  %v1826 = vand.u32 2147483647, %v1611
  %vm1827 = vcmp.eq.f32.partialorder %v1826, 8.507059e+37
  %v1828 = vand.u32 %v1611, 2147483648
  %v1829 = vor.u32 1.1754944e-38, %v1828
  %v1830 = vsel %vm1827, %v1829, %v1825
  %v1831 = vmul.f32 1.0, %v1830
  %v1832 = vrcp.pop %v1612
  %v1833 = vmul.f32 %v1612, %v1832
  %v1834 = vsub.f32 1.0, %v1833
  %v1835 = vmul.f32 %v1832, %v1834
  %v1836 = vadd.f32 %v1832, %v1835
  %vm1837 = vweird.f32 %v1612
  %vm1838 = vweird.f32 %v1832
  %vm1839 = vmor %vm1837, %vm1838
  %v1840 = vsel %vm1839, %v1832, %v1836
  %v1841 = vand.u32 2147483647, %v1612
  %vm1842 = vcmp.eq.f32.partialorder %v1841, 8.507059e+37
  %v1843 = vand.u32 %v1612, 2147483648
  %v1844 = vor.u32 1.1754944e-38, %v1843
  %v1845 = vsel %vm1842, %v1844, %v1840
  %v1846 = vmul.f32 1.0, %v1845
  %v1847 = vrcp.pop %v1613
  %v1848 = vmul.f32 %v1613, %v1847
  %v1849 = vsub.f32 1.0, %v1848
  %v1850 = vmul.f32 %v1847, %v1849
  %v1851 = vadd.f32 %v1847, %v1850
  %vm1852 = vweird.f32 %v1613
  %vm1853 = vweird.f32 %v1847
  %vm1854 = vmor %vm1852, %vm1853
  %v1855 = vsel %vm1854, %v1847, %v1851
  %v1856 = vand.u32 2147483647, %v1613
  %vm1857 = vcmp.eq.f32.partialorder %v1856, 8.507059e+37
  %v1858 = vand.u32 %v1613, 2147483648
  %v1859 = vor.u32 1.1754944e-38, %v1858
  %v1860 = vsel %vm1857, %v1859, %v1855
  %v1861 = vmul.f32 1.0, %v1860
  %v1862 = vrcp.pop %v1614
  %v1863 = vmul.f32 %v1614, %v1862
  %v1864 = vsub.f32 1.0, %v1863
  %v1865 = vmul.f32 %v1862, %v1864
  %v1866 = vadd.f32 %v1862, %v1865
  %vm1867 = vweird.f32 %v1614
  %vm1868 = vweird.f32 %v1862
  %vm1869 = vmor %vm1867, %vm1868
  %v1870 = vsel %vm1869, %v1862, %v1866
  %v1871 = vand.u32 2147483647, %v1614
  %vm1872 = vcmp.eq.f32.partialorder %v1871, 8.507059e+37
  %v1873 = vand.u32 %v1614, 2147483648
  %v1874 = vor.u32 1.1754944e-38, %v1873
  %v1875 = vsel %vm1872, %v1874, %v1870
  %v1876 = vmul.f32 1.0, %v1875
  %v1877 = vrcp.pop %v1615
  %v1878 = vmul.f32 %v1615, %v1877
  %v1879 = vsub.f32 1.0, %v1878
  %v1880 = vmul.f32 %v1877, %v1879
  %v1881 = vadd.f32 %v1877, %v1880
  %vm1882 = vweird.f32 %v1615
  %vm1883 = vweird.f32 %v1877
  %vm1884 = vmor %vm1882, %vm1883
  %v1885 = vsel %vm1884, %v1877, %v1881
  %v1886 = vand.u32 2147483647, %v1615
  %vm1887 = vcmp.eq.f32.partialorder %v1886, 8.507059e+37
  %v1888 = vand.u32 %v1615, 2147483648
  %v1889 = vor.u32 1.1754944e-38, %v1888
  %v1890 = vsel %vm1887, %v1889, %v1885
  %v1891 = vmul.f32 1.0, %v1890
  %v1892 = vrcp.pop %v1616
  %v1893 = vmul.f32 %v1616, %v1892
  %v1894 = vsub.f32 1.0, %v1893
  %v1895 = vmul.f32 %v1892, %v1894
  %v1896 = vadd.f32 %v1892, %v1895
  %vm1897 = vweird.f32 %v1616
  %vm1898 = vweird.f32 %v1892
  %vm1899 = vmor %vm1897, %vm1898
  %v1900 = vsel %vm1899, %v1892, %v1896
  %v1901 = vand.u32 2147483647, %v1616
  %vm1902 = vcmp.eq.f32.partialorder %v1901, 8.507059e+37
  %v1903 = vand.u32 %v1616, 2147483648
  %v1904 = vor.u32 1.1754944e-38, %v1903
  %v1905 = vsel %vm1902, %v1904, %v1900
  %v1906 = vmul.f32 1.0, %v1905
  %v1907 = vrcp.pop %v1617
  %v1908 = vmul.f32 %v1617, %v1907
  %v1909 = vsub.f32 1.0, %v1908
  %v1910 = vmul.f32 %v1907, %v1909
  %v1911 = vadd.f32 %v1907, %v1910
  %vm1912 = vweird.f32 %v1617
  %vm1913 = vweird.f32 %v1907
  %vm1914 = vmor %vm1912, %vm1913
  %v1915 = vsel %vm1914, %v1907, %v1911
  %v1916 = vand.u32 2147483647, %v1617
  %vm1917 = vcmp.eq.f32.partialorder %v1916, 8.507059e+37
  %v1918 = vand.u32 %v1617, 2147483648
  %v1919 = vor.u32 1.1754944e-38, %v1918
  %v1920 = vsel %vm1917, %v1919, %v1915
  %v1921 = vmul.f32 1.0, %v1920
  %v1922 = vrcp.pop %v1618
  %v1923 = vmul.f32 %v1618, %v1922
  %v1924 = vsub.f32 1.0, %v1923
  %v1925 = vmul.f32 %v1922, %v1924
  %v1926 = vadd.f32 %v1922, %v1925
  %vm1927 = vweird.f32 %v1618
  %vm1928 = vweird.f32 %v1922
  %vm1929 = vmor %vm1927, %vm1928
  %v1930 = vsel %vm1929, %v1922, %v1926
  %v1931 = vand.u32 2147483647, %v1618
  %vm1932 = vcmp.eq.f32.partialorder %v1931, 8.507059e+37
  %v1933 = vand.u32 %v1618, 2147483648
  %v1934 = vor.u32 1.1754944e-38, %v1933
  %v1935 = vsel %vm1932, %v1934, %v1930
  %v1936 = vmul.f32 1.0, %v1935
  %v1937 = vrcp.pop %v1619
  %v1938 = vmul.f32 %v1619, %v1937
  %v1939 = vsub.f32 1.0, %v1938
  %v1940 = vmul.f32 %v1937, %v1939
  %v1941 = vadd.f32 %v1937, %v1940
  %vm1942 = vweird.f32 %v1619
  %vm1943 = vweird.f32 %v1937
  %vm1944 = vmor %vm1942, %vm1943
  %v1945 = vsel %vm1944, %v1937, %v1941
  %v1946 = vand.u32 2147483647, %v1619
  %vm1947 = vcmp.eq.f32.partialorder %v1946, 8.507059e+37
  %v1948 = vand.u32 %v1619, 2147483648
  %v1949 = vor.u32 1.1754944e-38, %v1948
  %v1950 = vsel %vm1947, %v1949, %v1945
  %v1951 = vmul.f32 1.0, %v1950
  %v1952 = vrcp.pop %v1620
  %v1953 = vmul.f32 %v1620, %v1952
  %v1954 = vsub.f32 1.0, %v1953
  %v1955 = vmul.f32 %v1952, %v1954
  %v1956 = vadd.f32 %v1952, %v1955
  %vm1957 = vweird.f32 %v1620
  %vm1958 = vweird.f32 %v1952
  %vm1959 = vmor %vm1957, %vm1958
  %v1960 = vsel %vm1959, %v1952, %v1956
  %v1961 = vand.u32 2147483647, %v1620
  %vm1962 = vcmp.eq.f32.partialorder %v1961, 8.507059e+37
  %v1963 = vand.u32 %v1620, 2147483648
  %v1964 = vor.u32 1.1754944e-38, %v1963
  %v1965 = vsel %vm1962, %v1964, %v1960
  %v1966 = vmul.f32 1.0, %v1965
  %v1967 = vrcp.pop %v1621
  %v1968 = vmul.f32 %v1621, %v1967
  %v1969 = vsub.f32 1.0, %v1968
  %v1970 = vmul.f32 %v1967, %v1969
  %v1971 = vadd.f32 %v1967, %v1970
  %vm1972 = vweird.f32 %v1621
  %vm1973 = vweird.f32 %v1967
  %vm1974 = vmor %vm1972, %vm1973
  %v1975 = vsel %vm1974, %v1967, %v1971
  %v1976 = vand.u32 2147483647, %v1621
  %vm1977 = vcmp.eq.f32.partialorder %v1976, 8.507059e+37
  %v1978 = vand.u32 %v1621, 2147483648
  %v1979 = vor.u32 1.1754944e-38, %v1978
  %v1980 = vsel %vm1977, %v1979, %v1975
  %v1981 = vmul.f32 1.0, %v1980
  %v1982 = vmul.f32 %v1421, %v1636
  %v1983 = vmul.f32 %v1462, %v1651
  %v1984 = vmul.f32 %v1503, %v1666
  %v1985 = vmul.f32 %v1424, %v1681
  %v1986 = vmul.f32 %v1465, %v1696
  %v1987 = vmul.f32 %v1506, %v1711
  %v1988 = vmul.f32 %v1427, %v1726
  %v1989 = vmul.f32 %v1468, %v1741
  %v1990 = vmul.f32 %v1509, %v1756
  %v1991 = vmul.f32 %v1430, %v1771
  %v1992 = vmul.f32 %v1471, %v1786
  %v1993 = vmul.f32 %v1512, %v1801
  %v1994 = vmul.f32 %v1433, %v1816
  %v1995 = vmul.f32 %v1474, %v1831
  %v1996 = vmul.f32 %v1515, %v1846
  %v1997 = vmul.f32 %v1436, %v1861
  %v1998 = vmul.f32 %v1477, %v1876
  %v1999 = vmul.f32 %v1518, %v1891
  %v2000 = vmul.f32 %v1439, %v1906
  %v2001 = vmul.f32 %v1480, %v1921
  %v2002 = vmul.f32 %v1521, %v1936
  %v2003 = vmul.f32 %v1442, %v1951
  %v2004 = vmul.f32 %v1483, %v1966
  %v2005 = vmul.f32 %v1524, %v1981
  %v2006 = vld [vmem:[%s5] sm:$0x1]
  %v2007 = vld [vmem:[#allocation2] sm:$0x1]
  %2009 = vset.pattern.permute.xlu0 0
  %2010 = vperm.xlu0 %2009, %v2007
  %v2011 = vpop.permute.xlu0 %2010
  %v2013 = vperm.slane %v2011, 0
  %vm2014 = vcmask 523264
  %v2016 = vsel %vm2014, %v2006, 0
  %2018 = vmatpush.msra.mxu0 0.0
  %2019 = vmatpush.msra.mxu0 0.0
  %2020 = vmatpush.msra.mxu0 0.0
  %2021 = vmatpush.msra.mxu0 0.0
  %2022 = vmatpush.msra.mxu0 0.0
  %2023 = vmatpush.msra.mxu0 0.0
  %2024 = vmatpush.msra.mxu0 0.0
  %2025 = vmatpush.msra.mxu0 0.0
  %2026 = vmatpush.msra.mxu0 %v2003
  %2027 = vmatpush.msra.mxu0 %v2000
  %2028 = vmatpush.msra.mxu0 %v1997
  %2029 = vmatpush.msra.mxu0 %v1994
  %2030 = vmatpush.msra.mxu0 %v1991
  %2031 = vmatpush.msra.mxu0 %v1988
  %2032 = vmatpush.msra.mxu0 %v1985
  %2033 = vmatpush.msra.mxu0 %v1982
  %2034 = vmatmul.f32.gmra.mxu0 %v2016
  %v2035 = vpop.f32.mrf.mxu0
  %v2036 = vadd.f32 %v2013, %v2035
  %2037 = vdwg.mxu0
  %2038 = vmatpush.msra.mxu0 0.0
  %2039 = vmatpush.msra.mxu0 0.0
  %2040 = vmatpush.msra.mxu0 0.0
  %2041 = vmatpush.msra.mxu0 0.0
  %2042 = vmatpush.msra.mxu0 0.0
  %2043 = vmatpush.msra.mxu0 0.0
  %2044 = vmatpush.msra.mxu0 0.0
  %2045 = vmatpush.msra.mxu0 0.0
  %2046 = vmatpush.msra.mxu0 %v2004
  %2047 = vmatpush.msra.mxu0 %v2001
  %2048 = vmatpush.msra.mxu0 %v1998
  %2049 = vmatpush.msra.mxu0 %v1995
  %2050 = vmatpush.msra.mxu0 %v1992
  %2051 = vmatpush.msra.mxu0 %v1989
  %2052 = vmatpush.msra.mxu0 %v1986
  %2053 = vmatpush.msra.mxu0 %v1983
  %2054 = vmatmul.f32.gmra.mxu0 %v2016
  %v2055 = vpop.f32.mrf.mxu0
  %v2056 = vadd.f32 %v2013, %v2055
  %2057 = vdwg.mxu0
  %2058 = vmatpush.msra.mxu0 0.0
  %2059 = vmatpush.msra.mxu0 0.0
  %2060 = vmatpush.msra.mxu0 0.0
  %2061 = vmatpush.msra.mxu0 0.0
  %2062 = vmatpush.msra.mxu0 0.0
  %2063 = vmatpush.msra.mxu0 0.0
  %2064 = vmatpush.msra.mxu0 0.0
  %2065 = vmatpush.msra.mxu0 0.0
  %2066 = vmatpush.msra.mxu0 %v2005
  %2067 = vmatpush.msra.mxu0 %v2002
  %2068 = vmatpush.msra.mxu0 %v1999
  %2069 = vmatpush.msra.mxu0 %v1996
  %2070 = vmatpush.msra.mxu0 %v1993
  %2071 = vmatpush.msra.mxu0 %v1990
  %2072 = vmatpush.msra.mxu0 %v1987
  %2073 = vmatpush.msra.mxu0 %v1984
  %2074 = vmatmul.f32.gmra.mxu0 %v2016
  %v2075 = vpop.f32.mrf.mxu0
  %v2076 = vadd.f32 %v2013, %v2075
  %2077 = vdwg.mxu0
  %v2081 = vrot.slane %v2056, 7
  %v2082 = vrot.slane %v2076, 6
  %vm2083 = vcmask 1040384
  %v2084 = vsel %vm2083, %v2036, %v2081
  %vm2085 = vcmask 1041408
  %v2086 = vsel %vm2085, %v2084, %v2082
  %v2088 = vlaneseq
  %vm2089 = vcmp.ge.s32.totalorder %v2088, 0
  %vm2090 = vcmp.lt.s32.totalorder %v2088, 384
  %vm2091 = vmand %vm2089, %vm2090
  %2092 = vst.msk [vmem:[%s7] sm:$0x7] %vm2091, %v2086
  // Predicated region
  $region30: #{pinn_forward.1} parent=0 // pred_check
    _
  $region31: #{pinn_forward.1} parent=0 // pred_check_branch
    %2094 = sbr.rel (0) target = $region33
  $region32: #{pinn_forward.1} parent=0 // pred_region
    _
  $region33: #{pinn_forward.1} parent=0 // pred_fallthru
    _
  // Predicated region
  $region34: #{pinn_forward.1} parent=0 // pred_check
    _
  $region35: #{pinn_forward.1} parent=0 // pred_check_branch
    %2096 = sbr.rel (0) target = $region37
  $region36: #{pinn_forward.1} parent=0 // pred_region
    _
  $region37: #{pinn_forward.1} parent=0 // pred_fallthru
    _

</llo_original>
